<compile_context>
chip_gen: v6e
topology: v6e:2x2x1
jax: 0.10.0
libtpu: 0.0.40
codegen_flags: <defaults>
</compile_context>

<pallas_src>
import functools

import jax
import jax.numpy as jnp
from jax.experimental import pallas as pl
from jax.experimental.pallas import tpu as pltpu


def fixed_padding(kernel_size, dilation):
    k_eff = kernel_size + (kernel_size - 1) * (dilation - 1)
    pad_total = k_eff - 1
    pad_beg = pad_total // 2
    pad_end = pad_total - pad_beg
    return pad_beg, pad_end


# --------------------------------------------------------------------------
# Pallas kernel: one grid step = one image, everything fused, channel-major.
# --------------------------------------------------------------------------
def _inverted_residual_kernel(*refs, has_expand, use_res, dilation,
                              h, w, hp, wp, h_out, w_out, pad_beg):
    if has_expand:
        (x_ref, w_exp_ref, b_exp_ref, w_dw_ref, b_dw_ref,
         w_pw_ref, b_pw_ref, out_ref, hpad_ref) = refs
    else:
        (x_ref, w_dw_ref, b_dw_ref, w_pw_ref, b_pw_ref,
         out_ref, hpad_ref) = refs

    x_flat = x_ref[0].astype(jnp.float32)              # (inp, h*w), spatial on lanes

    # ---- 1x1 expand conv + folded BN + ReLU6 (channel-major matmul) ----
    if has_expand:
        b_exp = b_exp_ref[...]                          # (hid, 1)
        h_flat = jnp.dot(w_exp_ref[...], x_flat,
                         preferred_element_type=jnp.float32) + b_exp
        h_flat = jnp.clip(h_flat, 0.0, 6.0)             # (hid, h*w)
        # padded-zero pixels after expand+BN+ReLU6 are this per-channel constant
        border = jnp.clip(b_exp, 0.0, 6.0)              # (hid, 1)
    else:
        h_flat = x_flat
        border = jnp.zeros((h_flat.shape[0], 1), jnp.float32)

    hid = h_flat.shape[0]

    # ---- realize fixed zero padding inside VMEM (flat padded layout) ----
    hpad_ref[...] = jnp.broadcast_to(border, (hid, hp * wp))
    for r in range(h):                                   # interior rows
        dst = (r + pad_beg) * wp + pad_beg
        hpad_ref[:, dst:dst + w] = h_flat[:, r * w:(r + 1) * w]
    hpad = hpad_ref[...]                                 # (hid, hp*wp)

    # ---- 3x3 depthwise conv (stride 1) via shifted flat lane-window taps ----
    w_dw = w_dw_ref[...]                                 # (hid, 9), loaded once
    L = (h_out - 1) * wp + w_out                         # lanes covering all anchors
    acc = None
    for ky in range(3):
        for kx in range(3):
            t = ky * 3 + kx
            off = dilation * (ky * wp + kx)
            term = hpad[:, off:off + L] * w_dw[:, t:t + 1]
            acc = term if acc is None else acc + term    # first tap initializes acc
    act = jnp.clip(acc + b_dw_ref[...], 0.0, 6.0)        # (hid, L) + folded BN + ReLU6

    # ---- 1x1 projection + folded BN (junk in the per-row gap lanes is dropped) ----
    out_pad = jnp.dot(w_pw_ref[...], act,
                      preferred_element_type=jnp.float32) + b_pw_ref[...]  # (oup, L)

    # ---- compact rows (drop the wp - w_out gap), residual, lane-dense store ----
    for r in range(h_out):
        piece = out_pad[:, r * wp:r * wp + w_out]
        if use_res:                                      # stride==1 => w_out == w
            piece = piece + x_flat[:, r * w_out:(r + 1) * w_out]
        out_ref[0, :, r * w_out:(r + 1) * w_out] = piece.astype(out_ref.dtype)


# --------------------------------------------------------------------------
# Parameter construction (deterministic, BN folded, channel-major layout)
# --------------------------------------------------------------------------
def make_params(key, inp, oup, expand_ratio, dtype=jnp.float32):
    hidden = int(round(inp * expand_ratio))
    keys = jax.random.split(key, 16)
    eps = 1e-5

    def bn_fold(kg, kb, km, kv, c):
        gamma = 1.0 + 0.1 * jax.random.normal(kg, (c,), dtype)
        beta = 0.1 * jax.random.normal(kb, (c,), dtype)
        mean = 0.1 * jax.random.normal(km, (c,), dtype)
        var = jnp.abs(jax.random.normal(kv, (c,), dtype)) + 0.5
        scale = gamma / jnp.sqrt(var + eps)
        shift = beta - mean * scale
        return scale, shift

    params = {}
    if expand_ratio != 1:
        w = 0.1 * jax.random.normal(keys[0], (hidden, inp), dtype)      # (Cout, Cin)
        s, b = bn_fold(keys[1], keys[2], keys[3], keys[4], hidden)
        params["w_exp_t"] = w * s[:, None]
        params["b_exp"] = b[:, None]                                    # (hid, 1)

    w_dw = 0.1 * jax.random.normal(keys[5], (hidden, 9), dtype)         # (hid, ky*3+kx)
    s, b = bn_fold(keys[6], keys[7], keys[8], keys[9], hidden)
    params["w_dw"] = w_dw * s[:, None]
    params["b_dw"] = b[:, None]                                         # (hid, 1)

    w_pw = 0.1 * jax.random.normal(keys[10], (oup, hidden), dtype)      # (Cout, Cin)
    s, b = bn_fold(keys[11], keys[12], keys[13], keys[14], oup)
    params["w_pw_t"] = w_pw * s[:, None]
    params["b_pw"] = b[:, None]                                         # (oup, 1)
    return params


# --------------------------------------------------------------------------
# Wrapper: NCHW in / NCHW out, only free reshapes at the boundary.
# --------------------------------------------------------------------------
def inverted_residual_pallas(x_nchw, params, *, stride, dilation,
                             expand_ratio, inp, oup):
    # TODO(synk): stride==2 needs strided-lane extraction in this flat layout; only stride==1 implemented.
    assert stride == 1, "only stride==1 implemented in the optimized flat layout"
    pad_beg, pad_end = fixed_padding(3, dilation)
    n, _, h, w = x_nchw.shape
    hp, wp = h + pad_beg + pad_end, w + pad_beg + pad_end
    k_eff = 2 * dilation + 1
    h_out = (hp - k_eff) // stride + 1
    w_out = (wp - k_eff) // stride + 1
    use_res = (stride == 1 and inp == oup)
    has_expand = (expand_ratio != 1)
    hidden = int(round(inp * expand_ratio))

    x_flat = x_nchw.reshape(n, inp, h * w)               # free reshape (NCHW is channel-major)

    kernel = functools.partial(
        _inverted_residual_kernel,
        has_expand=has_expand, use_res=use_res, dilation=dilation,
        h=h, w=w, hp=hp, wp=wp, h_out=h_out, w_out=w_out, pad_beg=pad_beg)

    def full2d(a):
        return pl.BlockSpec(a.shape, lambda i: (0, 0))

    in_specs = [pl.BlockSpec((1, inp, h * w), lambda i: (i, 0, 0))]
    args = [x_flat]
    if has_expand:                                       # no dummy weight DMA otherwise
        in_specs += [full2d(params["w_exp_t"]), full2d(params["b_exp"])]
        args += [params["w_exp_t"], params["b_exp"]]
    in_specs += [full2d(params["w_dw"]), full2d(params["b_dw"]),
                 full2d(params["w_pw_t"]), full2d(params["b_pw"])]
    args += [params["w_dw"], params["b_dw"], params["w_pw_t"], params["b_pw"]]

    itemsize = jnp.dtype(x_nchw.dtype).itemsize
    flops = 2 * n * (hidden * inp * h * w
                     + 9 * hidden * h_out * w_out
                     + oup * hidden * h_out * w_out)
    bytes_accessed = (x_flat.size + n * oup * h_out * w_out) * itemsize \
        + sum(int(a.size) * itemsize for a in args[1:])

    # TODO(synk): for DeepLab-scale feature maps add a spatial row-tile grid axis
    # (+halo) and set vmem_limit_bytes so the expanded intermediate fits v7x VMEM.
    out = pl.pallas_call(
        kernel,
        out_shape=jax.ShapeDtypeStruct((n, oup, h_out * w_out), x_nchw.dtype),
        grid=(n,),
        in_specs=in_specs,
        out_specs=pl.BlockSpec((1, oup, h_out * w_out), lambda i: (i, 0, 0)),
        scratch_shapes=[pltpu.VMEM((hidden, hp * wp), jnp.float32)],
        compiler_params=pltpu.CompilerParams(
            dimension_semantics=("parallel",)),          # batch across v7x's 2 TCs
        cost_estimate=pl.CostEstimate(flops=flops, transcendentals=0,
                                      bytes_accessed=bytes_accessed),
    )(*args)
    return out.reshape(n, oup, h_out, w_out)             # free reshape -> NCHW


# --------------------------------------------------------------------------
# Pure-JAX reference (same folded params, NCHW) for a correctness check
# --------------------------------------------------------------------------
def inverted_residual_ref(x, params, *, stride, dilation, expand_ratio, inp, oup):
    pad_beg, pad_end = fixed_padding(3, dilation)
    n, _, h, w = x.shape
    xpad = jnp.pad(x, ((0, 0), (0, 0), (pad_beg, pad_end), (pad_beg, pad_end)))
    if expand_ratio != 1:
        hcur = jnp.einsum("oc,nchw->nohw", params["w_exp_t"], xpad) \
            + params["b_exp"][:, 0][None, :, None, None]
        hcur = jnp.clip(hcur, 0.0, 6.0)
    else:
        hcur = xpad
    hp, wp = h + pad_beg + pad_end, w + pad_beg + pad_end
    k_eff = 2 * dilation + 1
    h_out = (hp - k_eff) // stride + 1
    w_out = (wp - k_eff) // stride + 1
    hid = hcur.shape[1]
    acc = jnp.zeros((n, hid, h_out, w_out), jnp.float32)
    for ky in range(3):
        for kx in range(3):
            sl = hcur[:, :,
                      ky * dilation:ky * dilation + (h_out - 1) * stride + 1:stride,
                      kx * dilation:kx * dilation + (w_out - 1) * stride + 1:stride]
            acc = acc + sl * params["w_dw"][:, ky * 3 + kx][None, :, None, None]
    acc = jnp.clip(acc + params["b_dw"][:, 0][None, :, None, None], 0.0, 6.0)
    out = jnp.einsum("oc,nchw->nohw", params["w_pw_t"], acc) \
        + params["b_pw"][:, 0][None, :, None, None]
    if stride == 1 and inp == oup:
        out = out + x
    return out


if __name__ == "__main__":
    # Module config: InvertedResidual(inp=4, oup=4, stride=1, dilation=1, expand_ratio=6)
    inp, oup, stride, dilation, expand_ratio = 4, 4, 1, 1, 6

    key = jax.random.PRNGKey(0)
    k_x, k_p = jax.random.split(key)
    x = jax.random.normal(k_x, (2, inp, 16, 16), jnp.float32)   # NCHW like PyTorch
    params = make_params(k_p, inp, oup, expand_ratio)

    out = inverted_residual_pallas(x, params, stride=stride, dilation=dilation,
                                   expand_ratio=expand_ratio, inp=inp, oup=oup)
    out = jax.block_until_ready(out)

    ref = inverted_residual_ref(x, params, stride=stride, dilation=dilation,
                                expand_ratio=expand_ratio, inp=inp, oup=oup)
    assert out.shape == (2, oup, 16, 16), out.shape
    assert jnp.allclose(out, ref, atol=2e-4, rtol=2e-4), "mismatch vs reference"

    print("KERNEL_OK")
</pallas_src>

<mosaic_0001>
module attributes {stable_mosaic.version = 11 : i64} {
  func.func @_inverted_residual_kernel(%arg0: i32, %arg1: memref<1x4x256xf32, #tpu.memory_space<vmem>>, %arg2: memref<24x4xf32, #tpu.memory_space<vmem>>, %arg3: memref<24x1xf32, #tpu.memory_space<vmem>>, %arg4: memref<24x9xf32, #tpu.memory_space<vmem>>, %arg5: memref<24x1xf32, #tpu.memory_space<vmem>>, %arg6: memref<4x24xf32, #tpu.memory_space<vmem>>, %arg7: memref<4x1xf32, #tpu.memory_space<vmem>>, %arg8: memref<1x4x256xf32, #tpu.memory_space<vmem>>, %arg9: memref<24x324xf32, #tpu.memory_space<vmem>>) attributes {dimension_semantics = [#tpu.dimension_semantics<parallel>], iteration_bounds = array<i64: 2>, scalar_prefetch = 0 : i64, scratch_operands = 1 : i64, tpu.core_type = #tpu.core_type<tc>, window_params = [{transform_indices = @transform_0, window_bounds = array<i64: 1, 4, 256>}, {pipeline_mode = #tpu.pipeline_mode<synchronous>, transform_indices = @transform_1, window_bounds = array<i64: 24, 4>}, {pipeline_mode = #tpu.pipeline_mode<synchronous>, transform_indices = @transform_2, window_bounds = array<i64: 24, 1>}, {pipeline_mode = #tpu.pipeline_mode<synchronous>, transform_indices = @transform_3, window_bounds = array<i64: 24, 9>}, {pipeline_mode = #tpu.pipeline_mode<synchronous>, transform_indices = @transform_4, window_bounds = array<i64: 24, 1>}, {pipeline_mode = #tpu.pipeline_mode<synchronous>, transform_indices = @transform_5, window_bounds = array<i64: 4, 24>}, {pipeline_mode = #tpu.pipeline_mode<synchronous>, transform_indices = @transform_6, window_bounds = array<i64: 4, 1>}, {transform_indices = @transform_7, window_bounds = array<i64: 1, 4, 256>}]} {
    %c0 = arith.constant 0 : index
    %c0_0 = arith.constant 0 : index
    %c0_1 = arith.constant 0 : index
    %0 = vector.load %arg1[%c0, %c0_0, %c0_1] : memref<1x4x256xf32, #tpu.memory_space<vmem>>, vector<1x4x256xf32>
    %1 = vector.shape_cast %0 : vector<1x4x256xf32> to vector<4x256xf32>
    %c0_2 = arith.constant 0 : index
    %c0_3 = arith.constant 0 : index
    %2 = vector.load %arg3[%c0_2, %c0_3] : memref<24x1xf32, #tpu.memory_space<vmem>>, vector<24x1xf32>
    %c0_4 = arith.constant 0 : index
    %c0_5 = arith.constant 0 : index
    %3 = vector.load %arg2[%c0_4, %c0_5] : memref<24x4xf32, #tpu.memory_space<vmem>>, vector<24x4xf32>
    %cst = arith.constant dense<0.000000e+00> : vector<24x256xf32>
    %4 = tpu.matmul %3, %1, %cst {dimension_numbers = #tpu.dot_dimension_numbers<[1], [0], [0], [1], [0, 0, 1, 1], [], []>} : vector<24x4xf32>, vector<4x256xf32>, vector<24x256xf32> -> vector<24x256xf32>
    %5 = vector.broadcast %2 : vector<24x1xf32> to vector<24x256xf32>
    %6 = arith.addf %4, %5 : vector<24x256xf32>
    %cst_6 = arith.constant 0.000000e+00 : f32
    %cst_7 = arith.constant 6.000000e+00 : f32
    %7 = vector.broadcast %cst_6 : f32 to vector<24x256xf32>
    %8 = arith.maximumf %7, %6 : vector<24x256xf32>
    %9 = vector.broadcast %cst_7 : f32 to vector<24x256xf32>
    %10 = arith.minimumf %9, %8 : vector<24x256xf32>
    %cst_8 = arith.constant 0.000000e+00 : f32
    %cst_9 = arith.constant 6.000000e+00 : f32
    %11 = vector.broadcast %cst_8 : f32 to vector<24x1xf32>
    %12 = arith.maximumf %11, %2 : vector<24x1xf32>
    %13 = vector.broadcast %cst_9 : f32 to vector<24x1xf32>
    %14 = arith.minimumf %13, %12 : vector<24x1xf32>
    %15 = vector.shape_cast %14 : vector<24x1xf32> to vector<24x1xf32>
    %16 = vector.broadcast %15 : vector<24x1xf32> to vector<24x324xf32>
    %c0_10 = arith.constant 0 : index
    %c0_11 = arith.constant 0 : index
    %17 = vector.load %arg9[%c0_10, %c0_11] : memref<24x324xf32, #tpu.memory_space<vmem>>, vector<24x324xf32>
    tpu.vector_store %arg9[%c0_10, %c0_11], %16 {strides = array<i32>} : memref<24x324xf32, #tpu.memory_space<vmem>>, vector<24x324xf32>,
    %18 = vector.extract_strided_slice %10 {offsets = [0, 0], sizes = [24, 16], strides = [1, 1]} : vector<24x256xf32> to vector<24x16xf32>
    %c0_12 = arith.constant 0 : index
    %c19 = arith.constant 19 : index
    %19 = vector.load %arg9[%c0_12, %c19] : memref<24x324xf32, #tpu.memory_space<vmem>>, vector<24x16xf32>
    tpu.vector_store %arg9[%c0_12, %c19], %18 {strides = array<i32>} : memref<24x324xf32, #tpu.memory_space<vmem>>, vector<24x16xf32>,
    %20 = vector.extract_strided_slice %10 {offsets = [0, 16], sizes = [24, 16], strides = [1, 1]} : vector<24x256xf32> to vector<24x16xf32>
    %c0_13 = arith.constant 0 : index
    %c37 = arith.constant 37 : index
    %21 = vector.load %arg9[%c0_13, %c37] : memref<24x324xf32, #tpu.memory_space<vmem>>, vector<24x16xf32>
    tpu.vector_store %arg9[%c0_13, %c37], %20 {strides = array<i32>} : memref<24x324xf32, #tpu.memory_space<vmem>>, vector<24x16xf32>,
    %22 = vector.extract_strided_slice %10 {offsets = [0, 32], sizes = [24, 16], strides = [1, 1]} : vector<24x256xf32> to vector<24x16xf32>
    %c0_14 = arith.constant 0 : index
    %c55 = arith.constant 55 : index
    %23 = vector.load %arg9[%c0_14, %c55] : memref<24x324xf32, #tpu.memory_space<vmem>>, vector<24x16xf32>
    tpu.vector_store %arg9[%c0_14, %c55], %22 {strides = array<i32>} : memref<24x324xf32, #tpu.memory_space<vmem>>, vector<24x16xf32>,
    %24 = vector.extract_strided_slice %10 {offsets = [0, 48], sizes = [24, 16], strides = [1, 1]} : vector<24x256xf32> to vector<24x16xf32>
    %c0_15 = arith.constant 0 : index
    %c73 = arith.constant 73 : index
    %25 = vector.load %arg9[%c0_15, %c73] : memref<24x324xf32, #tpu.memory_space<vmem>>, vector<24x16xf32>
    tpu.vector_store %arg9[%c0_15, %c73], %24 {strides = array<i32>} : memref<24x324xf32, #tpu.memory_space<vmem>>, vector<24x16xf32>,
    %26 = vector.extract_strided_slice %10 {offsets = [0, 64], sizes = [24, 16], strides = [1, 1]} : vector<24x256xf32> to vector<24x16xf32>
    %c0_16 = arith.constant 0 : index
    %c91 = arith.constant 91 : index
    %27 = vector.load %arg9[%c0_16, %c91] : memref<24x324xf32, #tpu.memory_space<vmem>>, vector<24x16xf32>
    tpu.vector_store %arg9[%c0_16, %c91], %26 {strides = array<i32>} : memref<24x324xf32, #tpu.memory_space<vmem>>, vector<24x16xf32>,
    %28 = vector.extract_strided_slice %10 {offsets = [0, 80], sizes = [24, 16], strides = [1, 1]} : vector<24x256xf32> to vector<24x16xf32>
    %c0_17 = arith.constant 0 : index
    %c109 = arith.constant 109 : index
    %29 = vector.load %arg9[%c0_17, %c109] : memref<24x324xf32, #tpu.memory_space<vmem>>, vector<24x16xf32>
    tpu.vector_store %arg9[%c0_17, %c109], %28 {strides = array<i32>} : memref<24x324xf32, #tpu.memory_space<vmem>>, vector<24x16xf32>,
    %30 = vector.extract_strided_slice %10 {offsets = [0, 96], sizes = [24, 16], strides = [1, 1]} : vector<24x256xf32> to vector<24x16xf32>
    %c0_18 = arith.constant 0 : index
    %c127 = arith.constant 127 : index
    %31 = vector.load %arg9[%c0_18, %c127] : memref<24x324xf32, #tpu.memory_space<vmem>>, vector<24x16xf32>
    tpu.vector_store %arg9[%c0_18, %c127], %30 {strides = array<i32>} : memref<24x324xf32, #tpu.memory_space<vmem>>, vector<24x16xf32>,
    %32 = vector.extract_strided_slice %10 {offsets = [0, 112], sizes = [24, 16], strides = [1, 1]} : vector<24x256xf32> to vector<24x16xf32>
    %c0_19 = arith.constant 0 : index
    %c145 = arith.constant 145 : index
    %33 = vector.load %arg9[%c0_19, %c145] : memref<24x324xf32, #tpu.memory_space<vmem>>, vector<24x16xf32>
    tpu.vector_store %arg9[%c0_19, %c145], %32 {strides = array<i32>} : memref<24x324xf32, #tpu.memory_space<vmem>>, vector<24x16xf32>,
    %34 = vector.extract_strided_slice %10 {offsets = [0, 128], sizes = [24, 16], strides = [1, 1]} : vector<24x256xf32> to vector<24x16xf32>
    %c0_20 = arith.constant 0 : index
    %c163 = arith.constant 163 : index
    %35 = vector.load %arg9[%c0_20, %c163] : memref<24x324xf32, #tpu.memory_space<vmem>>, vector<24x16xf32>
    tpu.vector_store %arg9[%c0_20, %c163], %34 {strides = array<i32>} : memref<24x324xf32, #tpu.memory_space<vmem>>, vector<24x16xf32>,
    %36 = vector.extract_strided_slice %10 {offsets = [0, 144], sizes = [24, 16], strides = [1, 1]} : vector<24x256xf32> to vector<24x16xf32>
    %c0_21 = arith.constant 0 : index
    %c181 = arith.constant 181 : index
    %37 = vector.load %arg9[%c0_21, %c181] : memref<24x324xf32, #tpu.memory_space<vmem>>, vector<24x16xf32>
    tpu.vector_store %arg9[%c0_21, %c181], %36 {strides = array<i32>} : memref<24x324xf32, #tpu.memory_space<vmem>>, vector<24x16xf32>,
    %38 = vector.extract_strided_slice %10 {offsets = [0, 160], sizes = [24, 16], strides = [1, 1]} : vector<24x256xf32> to vector<24x16xf32>
    %c0_22 = arith.constant 0 : index
    %c199 = arith.constant 199 : index
    %39 = vector.load %arg9[%c0_22, %c199] : memref<24x324xf32, #tpu.memory_space<vmem>>, vector<24x16xf32>
    tpu.vector_store %arg9[%c0_22, %c199], %38 {strides = array<i32>} : memref<24x324xf32, #tpu.memory_space<vmem>>, vector<24x16xf32>,
    %40 = vector.extract_strided_slice %10 {offsets = [0, 176], sizes = [24, 16], strides = [1, 1]} : vector<24x256xf32> to vector<24x16xf32>
    %c0_23 = arith.constant 0 : index
    %c217 = arith.constant 217 : index
    %41 = vector.load %arg9[%c0_23, %c217] : memref<24x324xf32, #tpu.memory_space<vmem>>, vector<24x16xf32>
    tpu.vector_store %arg9[%c0_23, %c217], %40 {strides = array<i32>} : memref<24x324xf32, #tpu.memory_space<vmem>>, vector<24x16xf32>,
    %42 = vector.extract_strided_slice %10 {offsets = [0, 192], sizes = [24, 16], strides = [1, 1]} : vector<24x256xf32> to vector<24x16xf32>
    %c0_24 = arith.constant 0 : index
    %c235 = arith.constant 235 : index
    %43 = vector.load %arg9[%c0_24, %c235] : memref<24x324xf32, #tpu.memory_space<vmem>>, vector<24x16xf32>
    tpu.vector_store %arg9[%c0_24, %c235], %42 {strides = array<i32>} : memref<24x324xf32, #tpu.memory_space<vmem>>, vector<24x16xf32>,
    %44 = vector.extract_strided_slice %10 {offsets = [0, 208], sizes = [24, 16], strides = [1, 1]} : vector<24x256xf32> to vector<24x16xf32>
    %c0_25 = arith.constant 0 : index
    %c253 = arith.constant 253 : index
    %45 = vector.load %arg9[%c0_25, %c253] : memref<24x324xf32, #tpu.memory_space<vmem>>, vector<24x16xf32>
    tpu.vector_store %arg9[%c0_25, %c253], %44 {strides = array<i32>} : memref<24x324xf32, #tpu.memory_space<vmem>>, vector<24x16xf32>,
    %46 = vector.extract_strided_slice %10 {offsets = [0, 224], sizes = [24, 16], strides = [1, 1]} : vector<24x256xf32> to vector<24x16xf32>
    %c0_26 = arith.constant 0 : index
    %c271 = arith.constant 271 : index
    %47 = vector.load %arg9[%c0_26, %c271] : memref<24x324xf32, #tpu.memory_space<vmem>>, vector<24x16xf32>
    tpu.vector_store %arg9[%c0_26, %c271], %46 {strides = array<i32>} : memref<24x324xf32, #tpu.memory_space<vmem>>, vector<24x16xf32>,
    %48 = vector.extract_strided_slice %10 {offsets = [0, 240], sizes = [24, 16], strides = [1, 1]} : vector<24x256xf32> to vector<24x16xf32>
    %c0_27 = arith.constant 0 : index
    %c289 = arith.constant 289 : index
    %49 = vector.load %arg9[%c0_27, %c289] : memref<24x324xf32, #tpu.memory_space<vmem>>, vector<24x16xf32>
    tpu.vector_store %arg9[%c0_27, %c289], %48 {strides = array<i32>} : memref<24x324xf32, #tpu.memory_space<vmem>>, vector<24x16xf32>,
    %c0_28 = arith.constant 0 : index
    %c0_29 = arith.constant 0 : index
    %50 = vector.load %arg9[%c0_28, %c0_29] : memref<24x324xf32, #tpu.memory_space<vmem>>, vector<24x324xf32>
    %c0_30 = arith.constant 0 : index
    %c0_31 = arith.constant 0 : index
    %51 = vector.load %arg4[%c0_30, %c0_31] : memref<24x9xf32, #tpu.memory_space<vmem>>, vector<24x9xf32>
    %52 = vector.extract_strided_slice %50 {offsets = [0, 0], sizes = [24, 286], strides = [1, 1]} : vector<24x324xf32> to vector<24x286xf32>
    %53 = vector.extract_strided_slice %51 {offsets = [0, 0], sizes = [24, 1], strides = [1, 1]} : vector<24x9xf32> to vector<24x1xf32>
    %54 = vector.broadcast %53 : vector<24x1xf32> to vector<24x286xf32>
    %55 = arith.mulf %52, %54 : vector<24x286xf32>
    %56 = vector.extract_strided_slice %50 {offsets = [0, 1], sizes = [24, 286], strides = [1, 1]} : vector<24x324xf32> to vector<24x286xf32>
    %57 = vector.extract_strided_slice %51 {offsets = [0, 1], sizes = [24, 1], strides = [1, 1]} : vector<24x9xf32> to vector<24x1xf32>
    %58 = vector.broadcast %57 : vector<24x1xf32> to vector<24x286xf32>
    %59 = arith.mulf %56, %58 : vector<24x286xf32>
    %60 = arith.addf %55, %59 : vector<24x286xf32>
    %61 = vector.extract_strided_slice %50 {offsets = [0, 2], sizes = [24, 286], strides = [1, 1]} : vector<24x324xf32> to vector<24x286xf32>
    %62 = vector.extract_strided_slice %51 {offsets = [0, 2], sizes = [24, 1], strides = [1, 1]} : vector<24x9xf32> to vector<24x1xf32>
    %63 = vector.broadcast %62 : vector<24x1xf32> to vector<24x286xf32>
    %64 = arith.mulf %61, %63 : vector<24x286xf32>
    %65 = arith.addf %60, %64 : vector<24x286xf32>
    %66 = vector.extract_strided_slice %50 {offsets = [0, 18], sizes = [24, 286], strides = [1, 1]} : vector<24x324xf32> to vector<24x286xf32>
    %67 = vector.extract_strided_slice %51 {offsets = [0, 3], sizes = [24, 1], strides = [1, 1]} : vector<24x9xf32> to vector<24x1xf32>
    %68 = vector.broadcast %67 : vector<24x1xf32> to vector<24x286xf32>
    %69 = arith.mulf %66, %68 : vector<24x286xf32>
    %70 = arith.addf %65, %69 : vector<24x286xf32>
    %71 = vector.extract_strided_slice %50 {offsets = [0, 19], sizes = [24, 286], strides = [1, 1]} : vector<24x324xf32> to vector<24x286xf32>
    %72 = vector.extract_strided_slice %51 {offsets = [0, 4], sizes = [24, 1], strides = [1, 1]} : vector<24x9xf32> to vector<24x1xf32>
    %73 = vector.broadcast %72 : vector<24x1xf32> to vector<24x286xf32>
    %74 = arith.mulf %71, %73 : vector<24x286xf32>
    %75 = arith.addf %70, %74 : vector<24x286xf32>
    %76 = vector.extract_strided_slice %50 {offsets = [0, 20], sizes = [24, 286], strides = [1, 1]} : vector<24x324xf32> to vector<24x286xf32>
    %77 = vector.extract_strided_slice %51 {offsets = [0, 5], sizes = [24, 1], strides = [1, 1]} : vector<24x9xf32> to vector<24x1xf32>
    %78 = vector.broadcast %77 : vector<24x1xf32> to vector<24x286xf32>
    %79 = arith.mulf %76, %78 : vector<24x286xf32>
    %80 = arith.addf %75, %79 : vector<24x286xf32>
    %81 = vector.extract_strided_slice %50 {offsets = [0, 36], sizes = [24, 286], strides = [1, 1]} : vector<24x324xf32> to vector<24x286xf32>
    %82 = vector.extract_strided_slice %51 {offsets = [0, 6], sizes = [24, 1], strides = [1, 1]} : vector<24x9xf32> to vector<24x1xf32>
    %83 = vector.broadcast %82 : vector<24x1xf32> to vector<24x286xf32>
    %84 = arith.mulf %81, %83 : vector<24x286xf32>
    %85 = arith.addf %80, %84 : vector<24x286xf32>
    %86 = vector.extract_strided_slice %50 {offsets = [0, 37], sizes = [24, 286], strides = [1, 1]} : vector<24x324xf32> to vector<24x286xf32>
    %87 = vector.extract_strided_slice %51 {offsets = [0, 7], sizes = [24, 1], strides = [1, 1]} : vector<24x9xf32> to vector<24x1xf32>
    %88 = vector.broadcast %87 : vector<24x1xf32> to vector<24x286xf32>
    %89 = arith.mulf %86, %88 : vector<24x286xf32>
    %90 = arith.addf %85, %89 : vector<24x286xf32>
    %91 = vector.extract_strided_slice %50 {offsets = [0, 38], sizes = [24, 286], strides = [1, 1]} : vector<24x324xf32> to vector<24x286xf32>
    %92 = vector.extract_strided_slice %51 {offsets = [0, 8], sizes = [24, 1], strides = [1, 1]} : vector<24x9xf32> to vector<24x1xf32>
    %93 = vector.broadcast %92 : vector<24x1xf32> to vector<24x286xf32>
    %94 = arith.mulf %91, %93 : vector<24x286xf32>
    %95 = arith.addf %90, %94 : vector<24x286xf32>
    %c0_32 = arith.constant 0 : index
    %c0_33 = arith.constant 0 : index
    %96 = vector.load %arg5[%c0_32, %c0_33] : memref<24x1xf32, #tpu.memory_space<vmem>>, vector<24x1xf32>
    %97 = vector.broadcast %96 : vector<24x1xf32> to vector<24x286xf32>
    %98 = arith.addf %95, %97 : vector<24x286xf32>
    %cst_34 = arith.constant 0.000000e+00 : f32
    %cst_35 = arith.constant 6.000000e+00 : f32
    %99 = vector.broadcast %cst_34 : f32 to vector<24x286xf32>
    %100 = arith.maximumf %99, %98 : vector<24x286xf32>
    %101 = vector.broadcast %cst_35 : f32 to vector<24x286xf32>
    %102 = arith.minimumf %101, %100 : vector<24x286xf32>
    %c0_36 = arith.constant 0 : index
    %c0_37 = arith.constant 0 : index
    %103 = vector.load %arg6[%c0_36, %c0_37] : memref<4x24xf32, #tpu.memory_space<vmem>>, vector<4x24xf32>
    %cst_38 = arith.constant dense<0.000000e+00> : vector<4x286xf32>
    %104 = tpu.matmul %103, %102, %cst_38 {dimension_numbers = #tpu.dot_dimension_numbers<[1], [0], [0], [1], [0, 0, 1, 1], [], []>} : vector<4x24xf32>, vector<24x286xf32>, vector<4x286xf32> -> vector<4x286xf32>
    %c0_39 = arith.constant 0 : index
    %c0_40 = arith.constant 0 : index
    %105 = vector.load %arg7[%c0_39, %c0_40] : memref<4x1xf32, #tpu.memory_space<vmem>>, vector<4x1xf32>
    %106 = vector.broadcast %105 : vector<4x1xf32> to vector<4x286xf32>
    %107 = arith.addf %104, %106 : vector<4x286xf32>
    %108 = vector.extract_strided_slice %107 {offsets = [0, 0], sizes = [4, 16], strides = [1, 1]} : vector<4x286xf32> to vector<4x16xf32>
    %109 = vector.extract_strided_slice %1 {offsets = [0, 0], sizes = [4, 16], strides = [1, 1]} : vector<4x256xf32> to vector<4x16xf32>
    %110 = arith.addf %108, %109 : vector<4x16xf32>
    %c0_41 = arith.constant 0 : index
    %c0_42 = arith.constant 0 : index
    %c0_43 = arith.constant 0 : index
    %111 = vector.load %arg8[%c0_41, %c0_42, %c0_43] : memref<1x4x256xf32, #tpu.memory_space<vmem>>, vector<1x4x16xf32>
    %112 = vector.shape_cast %111 : vector<1x4x16xf32> to vector<4x16xf32>
    %113 = vector.shape_cast %110 : vector<4x16xf32> to vector<1x4x16xf32>
    tpu.vector_store %arg8[%c0_41, %c0_42, %c0_43], %113 {strides = array<i32>} : memref<1x4x256xf32, #tpu.memory_space<vmem>>, vector<1x4x16xf32>,
    %114 = vector.extract_strided_slice %107 {offsets = [0, 18], sizes = [4, 16], strides = [1, 1]} : vector<4x286xf32> to vector<4x16xf32>
    %115 = vector.extract_strided_slice %1 {offsets = [0, 16], sizes = [4, 16], strides = [1, 1]} : vector<4x256xf32> to vector<4x16xf32>
    %116 = arith.addf %114, %115 : vector<4x16xf32>
    %c0_44 = arith.constant 0 : index
    %c0_45 = arith.constant 0 : index
    %c16 = arith.constant 16 : index
    %117 = vector.load %arg8[%c0_44, %c0_45, %c16] : memref<1x4x256xf32, #tpu.memory_space<vmem>>, vector<1x4x16xf32>
    %118 = vector.shape_cast %117 : vector<1x4x16xf32> to vector<4x16xf32>
    %119 = vector.shape_cast %116 : vector<4x16xf32> to vector<1x4x16xf32>
    tpu.vector_store %arg8[%c0_44, %c0_45, %c16], %119 {strides = array<i32>} : memref<1x4x256xf32, #tpu.memory_space<vmem>>, vector<1x4x16xf32>,
    %120 = vector.extract_strided_slice %107 {offsets = [0, 36], sizes = [4, 16], strides = [1, 1]} : vector<4x286xf32> to vector<4x16xf32>
    %121 = vector.extract_strided_slice %1 {offsets = [0, 32], sizes = [4, 16], strides = [1, 1]} : vector<4x256xf32> to vector<4x16xf32>
    %122 = arith.addf %120, %121 : vector<4x16xf32>
    %c0_46 = arith.constant 0 : index
    %c0_47 = arith.constant 0 : index
    %c32 = arith.constant 32 : index
    %123 = vector.load %arg8[%c0_46, %c0_47, %c32] : memref<1x4x256xf32, #tpu.memory_space<vmem>>, vector<1x4x16xf32>
    %124 = vector.shape_cast %123 : vector<1x4x16xf32> to vector<4x16xf32>
    %125 = vector.shape_cast %122 : vector<4x16xf32> to vector<1x4x16xf32>
    tpu.vector_store %arg8[%c0_46, %c0_47, %c32], %125 {strides = array<i32>} : memref<1x4x256xf32, #tpu.memory_space<vmem>>, vector<1x4x16xf32>,
    %126 = vector.extract_strided_slice %107 {offsets = [0, 54], sizes = [4, 16], strides = [1, 1]} : vector<4x286xf32> to vector<4x16xf32>
    %127 = vector.extract_strided_slice %1 {offsets = [0, 48], sizes = [4, 16], strides = [1, 1]} : vector<4x256xf32> to vector<4x16xf32>
    %128 = arith.addf %126, %127 : vector<4x16xf32>
    %c0_48 = arith.constant 0 : index
    %c0_49 = arith.constant 0 : index
    %c48 = arith.constant 48 : index
    %129 = vector.load %arg8[%c0_48, %c0_49, %c48] : memref<1x4x256xf32, #tpu.memory_space<vmem>>, vector<1x4x16xf32>
    %130 = vector.shape_cast %129 : vector<1x4x16xf32> to vector<4x16xf32>
    %131 = vector.shape_cast %128 : vector<4x16xf32> to vector<1x4x16xf32>
    tpu.vector_store %arg8[%c0_48, %c0_49, %c48], %131 {strides = array<i32>} : memref<1x4x256xf32, #tpu.memory_space<vmem>>, vector<1x4x16xf32>,
    %132 = vector.extract_strided_slice %107 {offsets = [0, 72], sizes = [4, 16], strides = [1, 1]} : vector<4x286xf32> to vector<4x16xf32>
    %133 = vector.extract_strided_slice %1 {offsets = [0, 64], sizes = [4, 16], strides = [1, 1]} : vector<4x256xf32> to vector<4x16xf32>
    %134 = arith.addf %132, %133 : vector<4x16xf32>
    %c0_50 = arith.constant 0 : index
    %c0_51 = arith.constant 0 : index
    %c64 = arith.constant 64 : index
    %135 = vector.load %arg8[%c0_50, %c0_51, %c64] : memref<1x4x256xf32, #tpu.memory_space<vmem>>, vector<1x4x16xf32>
    %136 = vector.shape_cast %135 : vector<1x4x16xf32> to vector<4x16xf32>
    %137 = vector.shape_cast %134 : vector<4x16xf32> to vector<1x4x16xf32>
    tpu.vector_store %arg8[%c0_50, %c0_51, %c64], %137 {strides = array<i32>} : memref<1x4x256xf32, #tpu.memory_space<vmem>>, vector<1x4x16xf32>,
    %138 = vector.extract_strided_slice %107 {offsets = [0, 90], sizes = [4, 16], strides = [1, 1]} : vector<4x286xf32> to vector<4x16xf32>
    %139 = vector.extract_strided_slice %1 {offsets = [0, 80], sizes = [4, 16], strides = [1, 1]} : vector<4x256xf32> to vector<4x16xf32>
    %140 = arith.addf %138, %139 : vector<4x16xf32>
    %c0_52 = arith.constant 0 : index
    %c0_53 = arith.constant 0 : index
    %c80 = arith.constant 80 : index
    %141 = vector.load %arg8[%c0_52, %c0_53, %c80] : memref<1x4x256xf32, #tpu.memory_space<vmem>>, vector<1x4x16xf32>
    %142 = vector.shape_cast %141 : vector<1x4x16xf32> to vector<4x16xf32>
    %143 = vector.shape_cast %140 : vector<4x16xf32> to vector<1x4x16xf32>
    tpu.vector_store %arg8[%c0_52, %c0_53, %c80], %143 {strides = array<i32>} : memref<1x4x256xf32, #tpu.memory_space<vmem>>, vector<1x4x16xf32>,
    %144 = vector.extract_strided_slice %107 {offsets = [0, 108], sizes = [4, 16], strides = [1, 1]} : vector<4x286xf32> to vector<4x16xf32>
    %145 = vector.extract_strided_slice %1 {offsets = [0, 96], sizes = [4, 16], strides = [1, 1]} : vector<4x256xf32> to vector<4x16xf32>
    %146 = arith.addf %144, %145 : vector<4x16xf32>
    %c0_54 = arith.constant 0 : index
    %c0_55 = arith.constant 0 : index
    %c96 = arith.constant 96 : index
    %147 = vector.load %arg8[%c0_54, %c0_55, %c96] : memref<1x4x256xf32, #tpu.memory_space<vmem>>, vector<1x4x16xf32>
    %148 = vector.shape_cast %147 : vector<1x4x16xf32> to vector<4x16xf32>
    %149 = vector.shape_cast %146 : vector<4x16xf32> to vector<1x4x16xf32>
    tpu.vector_store %arg8[%c0_54, %c0_55, %c96], %149 {strides = array<i32>} : memref<1x4x256xf32, #tpu.memory_space<vmem>>, vector<1x4x16xf32>,
    %150 = vector.extract_strided_slice %107 {offsets = [0, 126], sizes = [4, 16], strides = [1, 1]} : vector<4x286xf32> to vector<4x16xf32>
    %151 = vector.extract_strided_slice %1 {offsets = [0, 112], sizes = [4, 16], strides = [1, 1]} : vector<4x256xf32> to vector<4x16xf32>
    %152 = arith.addf %150, %151 : vector<4x16xf32>
    %c0_56 = arith.constant 0 : index
    %c0_57 = arith.constant 0 : index
    %c112 = arith.constant 112 : index
    %153 = vector.load %arg8[%c0_56, %c0_57, %c112] : memref<1x4x256xf32, #tpu.memory_space<vmem>>, vector<1x4x16xf32>
    %154 = vector.shape_cast %153 : vector<1x4x16xf32> to vector<4x16xf32>
    %155 = vector.shape_cast %152 : vector<4x16xf32> to vector<1x4x16xf32>
    tpu.vector_store %arg8[%c0_56, %c0_57, %c112], %155 {strides = array<i32>} : memref<1x4x256xf32, #tpu.memory_space<vmem>>, vector<1x4x16xf32>,
    %156 = vector.extract_strided_slice %107 {offsets = [0, 144], sizes = [4, 16], strides = [1, 1]} : vector<4x286xf32> to vector<4x16xf32>
    %157 = vector.extract_strided_slice %1 {offsets = [0, 128], sizes = [4, 16], strides = [1, 1]} : vector<4x256xf32> to vector<4x16xf32>
    %158 = arith.addf %156, %157 : vector<4x16xf32>
    %c0_58 = arith.constant 0 : index
    %c0_59 = arith.constant 0 : index
    %c128 = arith.constant 128 : index
    %159 = vector.load %arg8[%c0_58, %c0_59, %c128] : memref<1x4x256xf32, #tpu.memory_space<vmem>>, vector<1x4x16xf32>
    %160 = vector.shape_cast %159 : vector<1x4x16xf32> to vector<4x16xf32>
    %161 = vector.shape_cast %158 : vector<4x16xf32> to vector<1x4x16xf32>
    tpu.vector_store %arg8[%c0_58, %c0_59, %c128], %161 {strides = array<i32>} : memref<1x4x256xf32, #tpu.memory_space<vmem>>, vector<1x4x16xf32>,
    %162 = vector.extract_strided_slice %107 {offsets = [0, 162], sizes = [4, 16], strides = [1, 1]} : vector<4x286xf32> to vector<4x16xf32>
    %163 = vector.extract_strided_slice %1 {offsets = [0, 144], sizes = [4, 16], strides = [1, 1]} : vector<4x256xf32> to vector<4x16xf32>
    %164 = arith.addf %162, %163 : vector<4x16xf32>
    %c0_60 = arith.constant 0 : index
    %c0_61 = arith.constant 0 : index
    %c144 = arith.constant 144 : index
    %165 = vector.load %arg8[%c0_60, %c0_61, %c144] : memref<1x4x256xf32, #tpu.memory_space<vmem>>, vector<1x4x16xf32>
    %166 = vector.shape_cast %165 : vector<1x4x16xf32> to vector<4x16xf32>
    %167 = vector.shape_cast %164 : vector<4x16xf32> to vector<1x4x16xf32>
    tpu.vector_store %arg8[%c0_60, %c0_61, %c144], %167 {strides = array<i32>} : memref<1x4x256xf32, #tpu.memory_space<vmem>>, vector<1x4x16xf32>,
    %168 = vector.extract_strided_slice %107 {offsets = [0, 180], sizes = [4, 16], strides = [1, 1]} : vector<4x286xf32> to vector<4x16xf32>
    %169 = vector.extract_strided_slice %1 {offsets = [0, 160], sizes = [4, 16], strides = [1, 1]} : vector<4x256xf32> to vector<4x16xf32>
    %170 = arith.addf %168, %169 : vector<4x16xf32>
    %c0_62 = arith.constant 0 : index
    %c0_63 = arith.constant 0 : index
    %c160 = arith.constant 160 : index
    %171 = vector.load %arg8[%c0_62, %c0_63, %c160] : memref<1x4x256xf32, #tpu.memory_space<vmem>>, vector<1x4x16xf32>
    %172 = vector.shape_cast %171 : vector<1x4x16xf32> to vector<4x16xf32>
    %173 = vector.shape_cast %170 : vector<4x16xf32> to vector<1x4x16xf32>
    tpu.vector_store %arg8[%c0_62, %c0_63, %c160], %173 {strides = array<i32>} : memref<1x4x256xf32, #tpu.memory_space<vmem>>, vector<1x4x16xf32>,
    %174 = vector.extract_strided_slice %107 {offsets = [0, 198], sizes = [4, 16], strides = [1, 1]} : vector<4x286xf32> to vector<4x16xf32>
    %175 = vector.extract_strided_slice %1 {offsets = [0, 176], sizes = [4, 16], strides = [1, 1]} : vector<4x256xf32> to vector<4x16xf32>
    %176 = arith.addf %174, %175 : vector<4x16xf32>
    %c0_64 = arith.constant 0 : index
    %c0_65 = arith.constant 0 : index
    %c176 = arith.constant 176 : index
    %177 = vector.load %arg8[%c0_64, %c0_65, %c176] : memref<1x4x256xf32, #tpu.memory_space<vmem>>, vector<1x4x16xf32>
    %178 = vector.shape_cast %177 : vector<1x4x16xf32> to vector<4x16xf32>
    %179 = vector.shape_cast %176 : vector<4x16xf32> to vector<1x4x16xf32>
    tpu.vector_store %arg8[%c0_64, %c0_65, %c176], %179 {strides = array<i32>} : memref<1x4x256xf32, #tpu.memory_space<vmem>>, vector<1x4x16xf32>,
    %180 = vector.extract_strided_slice %107 {offsets = [0, 216], sizes = [4, 16], strides = [1, 1]} : vector<4x286xf32> to vector<4x16xf32>
    %181 = vector.extract_strided_slice %1 {offsets = [0, 192], sizes = [4, 16], strides = [1, 1]} : vector<4x256xf32> to vector<4x16xf32>
    %182 = arith.addf %180, %181 : vector<4x16xf32>
    %c0_66 = arith.constant 0 : index
    %c0_67 = arith.constant 0 : index
    %c192 = arith.constant 192 : index
    %183 = vector.load %arg8[%c0_66, %c0_67, %c192] : memref<1x4x256xf32, #tpu.memory_space<vmem>>, vector<1x4x16xf32>
    %184 = vector.shape_cast %183 : vector<1x4x16xf32> to vector<4x16xf32>
    %185 = vector.shape_cast %182 : vector<4x16xf32> to vector<1x4x16xf32>
    tpu.vector_store %arg8[%c0_66, %c0_67, %c192], %185 {strides = array<i32>} : memref<1x4x256xf32, #tpu.memory_space<vmem>>, vector<1x4x16xf32>,
    %186 = vector.extract_strided_slice %107 {offsets = [0, 234], sizes = [4, 16], strides = [1, 1]} : vector<4x286xf32> to vector<4x16xf32>
    %187 = vector.extract_strided_slice %1 {offsets = [0, 208], sizes = [4, 16], strides = [1, 1]} : vector<4x256xf32> to vector<4x16xf32>
    %188 = arith.addf %186, %187 : vector<4x16xf32>
    %c0_68 = arith.constant 0 : index
    %c0_69 = arith.constant 0 : index
    %c208 = arith.constant 208 : index
    %189 = vector.load %arg8[%c0_68, %c0_69, %c208] : memref<1x4x256xf32, #tpu.memory_space<vmem>>, vector<1x4x16xf32>
    %190 = vector.shape_cast %189 : vector<1x4x16xf32> to vector<4x16xf32>
    %191 = vector.shape_cast %188 : vector<4x16xf32> to vector<1x4x16xf32>
    tpu.vector_store %arg8[%c0_68, %c0_69, %c208], %191 {strides = array<i32>} : memref<1x4x256xf32, #tpu.memory_space<vmem>>, vector<1x4x16xf32>,
    %192 = vector.extract_strided_slice %107 {offsets = [0, 252], sizes = [4, 16], strides = [1, 1]} : vector<4x286xf32> to vector<4x16xf32>
    %193 = vector.extract_strided_slice %1 {offsets = [0, 224], sizes = [4, 16], strides = [1, 1]} : vector<4x256xf32> to vector<4x16xf32>
    %194 = arith.addf %192, %193 : vector<4x16xf32>
    %c0_70 = arith.constant 0 : index
    %c0_71 = arith.constant 0 : index
    %c224 = arith.constant 224 : index
    %195 = vector.load %arg8[%c0_70, %c0_71, %c224] : memref<1x4x256xf32, #tpu.memory_space<vmem>>, vector<1x4x16xf32>
    %196 = vector.shape_cast %195 : vector<1x4x16xf32> to vector<4x16xf32>
    %197 = vector.shape_cast %194 : vector<4x16xf32> to vector<1x4x16xf32>
    tpu.vector_store %arg8[%c0_70, %c0_71, %c224], %197 {strides = array<i32>} : memref<1x4x256xf32, #tpu.memory_space<vmem>>, vector<1x4x16xf32>,
    %198 = vector.extract_strided_slice %107 {offsets = [0, 270], sizes = [4, 16], strides = [1, 1]} : vector<4x286xf32> to vector<4x16xf32>
    %199 = vector.extract_strided_slice %1 {offsets = [0, 240], sizes = [4, 16], strides = [1, 1]} : vector<4x256xf32> to vector<4x16xf32>
    %200 = arith.addf %198, %199 : vector<4x16xf32>
    %c0_72 = arith.constant 0 : index
    %c0_73 = arith.constant 0 : index
    %c240 = arith.constant 240 : index
    %201 = vector.load %arg8[%c0_72, %c0_73, %c240] : memref<1x4x256xf32, #tpu.memory_space<vmem>>, vector<1x4x16xf32>
    %202 = vector.shape_cast %201 : vector<1x4x16xf32> to vector<4x16xf32>
    %203 = vector.shape_cast %200 : vector<4x16xf32> to vector<1x4x16xf32>
    tpu.vector_store %arg8[%c0_72, %c0_73, %c240], %203 {strides = array<i32>} : memref<1x4x256xf32, #tpu.memory_space<vmem>>, vector<1x4x16xf32>,
    return
  }
  func.func @transform_0(%arg0: i32) -> (i32, i32, i32) {
    %c0_i32 = arith.constant 0 : i32
    %c0_i32_0 = arith.constant 0 : i32
    %c0_i32_1 = arith.constant 0 : i32
    return %arg0, %c0_i32, %c0_i32_0 : i32, i32, i32
  }
  func.func @transform_1(%arg0: i32) -> (i32, i32) {
    %c0_i32 = arith.constant 0 : i32
    %c0_i32_0 = arith.constant 0 : i32
    %c0_i32_1 = arith.constant 0 : i32
    return %c0_i32, %c0_i32_0 : i32, i32
  }
  func.func @transform_2(%arg0: i32) -> (i32, i32) {
    %c0_i32 = arith.constant 0 : i32
    %c0_i32_0 = arith.constant 0 : i32
    %c0_i32_1 = arith.constant 0 : i32
    return %c0_i32, %c0_i32_0 : i32, i32
  }
  func.func @transform_3(%arg0: i32) -> (i32, i32) {
    %c0_i32 = arith.constant 0 : i32
    %c0_i32_0 = arith.constant 0 : i32
    %c0_i32_1 = arith.constant 0 : i32
    return %c0_i32, %c0_i32_0 : i32, i32
  }
  func.func @transform_4(%arg0: i32) -> (i32, i32) {
    %c0_i32 = arith.constant 0 : i32
    %c0_i32_0 = arith.constant 0 : i32
    %c0_i32_1 = arith.constant 0 : i32
    return %c0_i32, %c0_i32_0 : i32, i32
  }
  func.func @transform_5(%arg0: i32) -> (i32, i32) {
    %c0_i32 = arith.constant 0 : i32
    %c0_i32_0 = arith.constant 0 : i32
    %c0_i32_1 = arith.constant 0 : i32
    return %c0_i32, %c0_i32_0 : i32, i32
  }
  func.func @transform_6(%arg0: i32) -> (i32, i32) {
    %c0_i32 = arith.constant 0 : i32
    %c0_i32_0 = arith.constant 0 : i32
    %c0_i32_1 = arith.constant 0 : i32
    return %c0_i32, %c0_i32_0 : i32, i32
  }
  func.func @transform_7(%arg0: i32) -> (i32, i32, i32) {
    %c0_i32 = arith.constant 0 : i32
    %c0_i32_0 = arith.constant 0 : i32
    %c0_i32_1 = arith.constant 0 : i32
    return %arg0, %c0_i32, %c0_i32_0 : i32, i32, i32
  }
}

</mosaic_0001>

<llo_original>
// kernel: tpu_custom_call.1
$region0: #{tpu_custom_call.1}
  #allocation0 [shape = 'u32[]', space=smem, size = 0x4, offset = 0x4, fixed_abs, tag = 'smem constant byte address 0x4 - core index']
  #allocation1 [shape = 'u32[144,128]{1,0:T(1,128)}', space=vmem, size = 0x12000, scoped, tag = 'internal scratch']
  #allocation2 [shape = 'f32[24,324]{1,0:T(8,128)}', space=vmem, size = 0x9000, scoped, tag = 'scratch operand']
  %s0 = inlined_call_operand.vmem [shape: f32[2,4,256], index: 0, kind: input, shape index: {}]
  %s1 = inlined_call_operand.vmem [shape: f32[24,4], index: 1, kind: input, shape index: {}]
  %s2 = inlined_call_operand.vmem [shape: f32[24,1], index: 2, kind: input, shape index: {}]
  %s3 = inlined_call_operand.vmem [shape: f32[24,9], index: 3, kind: input, shape index: {}]
  %s4 = inlined_call_operand.vmem [shape: f32[24,1], index: 4, kind: input, shape index: {}]
  %s5 = inlined_call_operand.vmem [shape: f32[4,24], index: 5, kind: input, shape index: {}]
  %s6 = inlined_call_operand.vmem [shape: f32[4,1], index: 6, kind: input, shape index: {}]
  %s7 = inlined_call_operand.hbm [shape: f32[2,4,256], index: 7, kind: output, shape index: {}]
  %s8 = sld [smem:[#allocation0]]
  $region61: #{tpu_custom_call.1} parent=0
    _
  %s10 = ssub.s32 1, %s8
  %s11 = scalar_select 0, %s10, %s8
  $region1: #{tpu_custom_call.1} parent=0
    #allocation3 [shape = 'u8[8192]{0}', space=vmem, size = 0x2000, scoped, tag = 'output window, operand 0']
    #allocation4 [shape = 's32[2]{0}', space=sflag, size = 0x8, scoped, tag = 'scoped memory for tpu_custom_call.1']
    %12 = vsyncpa [#allocation4], 0
    %s13 = scalar_lea.sflag [#allocation4], 1
    %14 = vsyncpa %s13, 0
    loop: start=0, step=1, limit=4
    $region2: #{tpu_custom_call.1} parent=1 // loop_pre_header
      _
    $region3: #{tpu_custom_call.1} parent=1 // loop_header
      %s16 = sphi 0, %s20
      %p17 = scmp.ge.s32.totalorder %s16, 4
      %s26 = sphi 0, %s28
      %s29 = sphi 0, %s26
      %s30 = sphi 0, %s29
      %s46 = sphi 0, %s30
      %s50 = sphi 0, %s50
      %s52 = sphi 0, %s50
      %s53 = sphi 0, %s52
      %s67 = sphi 0, %s53
      %s71 = sphi 0, %s71
      %s73 = sphi 0, %s71
      %s74 = sphi 0, %s73
      %s88 = sphi 0, %s74
      %s92 = sphi 0, %s92
      %s94 = sphi 0, %s92
      %s95 = sphi 0, %s94
      %s109 = sphi 0, %s95
      %s113 = sphi 0, %s113
      %s115 = sphi 0, %s113
      %s116 = sphi 0, %s115
      %s130 = sphi 0, %s116
      %s134 = sphi 0, %s134
      %s136 = sphi 0, %s134
      %s137 = sphi 0, %s136
      %s151 = sphi 0, %s137
      %s155 = sphi 0, %s155
      %s157 = sphi 0, %s155
      %s158 = sphi 0, %s157
      %s172 = sphi 0, %s158
      %s178 = sphi 0, %s180
      %s181 = sphi 0, %s178
      %s182 = sphi 0, %s181
      %s198 = sphi 0, %s182
    $region4: #{tpu_custom_call.1} parent=1 // loop_header_branch
      %19 = sbr.rel (%p17) target = $region8
    $region5: #{tpu_custom_call.1} parent=1 // loop_body
      %s21 = ssub.s32 %s16, 1
      %s22 = ssub.s32 %s16, 2
      %s23 = sadd.s32 %s16, 1
      %s24 = ssub.s32 %s16, %s23
      %p25 = scmp.eq.s32.totalorder %s24, 0
      %s27 = sadd.s32 %s26, 1
      %s28 = scalar_select %p25, %s26, %s27
      %p31 = pneg %p25
      %p32 = scmp.eq.s32.totalorder %s16, 1
      %p33 = por %p31, %p32
      %p34 = scmp.ne.s32.totalorder %s26, %s29
      %p35 = scmp.eq.s32.totalorder %s16, 0
      %p36 = por %p34, %p35
      %p37 = scmp.ne.s32.totalorder %s26, %s29
      %p38 = scmp.eq.s32.totalorder %s21, 1
      %p39 = por %p37, %p38
      %p40 = scmp.ne.s32.totalorder %s29, %s30
      %p41 = scmp.eq.s32.totalorder %s21, 0
      %p42 = por %p40, %p41
      %p43 = scmp.ne.s32.totalorder %s29, %s30
      %p44 = scmp.eq.s32.totalorder %s22, 1
      %p45 = por %p43, %p44
      %p47 = scmp.ne.s32.totalorder %s30, %s46
      %p48 = scmp.eq.s32.totalorder %s22, 0
      %p49 = por %p47, %p48
      %s51 = sadd.s32 %s50, 1
      %p54 = scmp.eq.s32.totalorder %s16, 1
      %p55 = scmp.ne.s32.totalorder %s50, %s52
      %p56 = scmp.eq.s32.totalorder %s16, 0
      %p57 = por %p55, %p56
      %p58 = scmp.ne.s32.totalorder %s50, %s52
      %p59 = scmp.eq.s32.totalorder %s21, 1
      %p60 = por %p58, %p59
      %p61 = scmp.ne.s32.totalorder %s52, %s53
      %p62 = scmp.eq.s32.totalorder %s21, 0
      %p63 = por %p61, %p62
      %p64 = scmp.ne.s32.totalorder %s52, %s53
      %p65 = scmp.eq.s32.totalorder %s22, 1
      %p66 = por %p64, %p65
      %p68 = scmp.ne.s32.totalorder %s53, %s67
      %p69 = scmp.eq.s32.totalorder %s22, 0
      %p70 = por %p68, %p69
      %s72 = sadd.s32 %s71, 1
      %p75 = scmp.eq.s32.totalorder %s16, 1
      %p76 = scmp.ne.s32.totalorder %s71, %s73
      %p77 = scmp.eq.s32.totalorder %s16, 0
      %p78 = por %p76, %p77
      %p79 = scmp.ne.s32.totalorder %s71, %s73
      %p80 = scmp.eq.s32.totalorder %s21, 1
      %p81 = por %p79, %p80
      %p82 = scmp.ne.s32.totalorder %s73, %s74
      %p83 = scmp.eq.s32.totalorder %s21, 0
      %p84 = por %p82, %p83
      %p85 = scmp.ne.s32.totalorder %s73, %s74
      %p86 = scmp.eq.s32.totalorder %s22, 1
      %p87 = por %p85, %p86
      %p89 = scmp.ne.s32.totalorder %s74, %s88
      %p90 = scmp.eq.s32.totalorder %s22, 0
      %p91 = por %p89, %p90
      %s93 = sadd.s32 %s92, 1
      %p96 = scmp.eq.s32.totalorder %s16, 1
      %p97 = scmp.ne.s32.totalorder %s92, %s94
      %p98 = scmp.eq.s32.totalorder %s16, 0
      %p99 = por %p97, %p98
      %p100 = scmp.ne.s32.totalorder %s92, %s94
      %p101 = scmp.eq.s32.totalorder %s21, 1
      %p102 = por %p100, %p101
      %p103 = scmp.ne.s32.totalorder %s94, %s95
      %p104 = scmp.eq.s32.totalorder %s21, 0
      %p105 = por %p103, %p104
      %p106 = scmp.ne.s32.totalorder %s94, %s95
      %p107 = scmp.eq.s32.totalorder %s22, 1
      %p108 = por %p106, %p107
      %p110 = scmp.ne.s32.totalorder %s95, %s109
      %p111 = scmp.eq.s32.totalorder %s22, 0
      %p112 = por %p110, %p111
      %s114 = sadd.s32 %s113, 1
      %p117 = scmp.eq.s32.totalorder %s16, 1
      %p118 = scmp.ne.s32.totalorder %s113, %s115
      %p119 = scmp.eq.s32.totalorder %s16, 0
      %p120 = por %p118, %p119
      %p121 = scmp.ne.s32.totalorder %s113, %s115
      %p122 = scmp.eq.s32.totalorder %s21, 1
      %p123 = por %p121, %p122
      %p124 = scmp.ne.s32.totalorder %s115, %s116
      %p125 = scmp.eq.s32.totalorder %s21, 0
      %p126 = por %p124, %p125
      %p127 = scmp.ne.s32.totalorder %s115, %s116
      %p128 = scmp.eq.s32.totalorder %s22, 1
      %p129 = por %p127, %p128
      %p131 = scmp.ne.s32.totalorder %s116, %s130
      %p132 = scmp.eq.s32.totalorder %s22, 0
      %p133 = por %p131, %p132
      %s135 = sadd.s32 %s134, 1
      %p138 = scmp.eq.s32.totalorder %s16, 1
      %p139 = scmp.ne.s32.totalorder %s134, %s136
      %p140 = scmp.eq.s32.totalorder %s16, 0
      %p141 = por %p139, %p140
      %p142 = scmp.ne.s32.totalorder %s134, %s136
      %p143 = scmp.eq.s32.totalorder %s21, 1
      %p144 = por %p142, %p143
      %p145 = scmp.ne.s32.totalorder %s136, %s137
      %p146 = scmp.eq.s32.totalorder %s21, 0
      %p147 = por %p145, %p146
      %p148 = scmp.ne.s32.totalorder %s136, %s137
      %p149 = scmp.eq.s32.totalorder %s22, 1
      %p150 = por %p148, %p149
      %p152 = scmp.ne.s32.totalorder %s137, %s151
      %p153 = scmp.eq.s32.totalorder %s22, 0
      %p154 = por %p152, %p153
      %s156 = sadd.s32 %s155, 1
      %p159 = scmp.eq.s32.totalorder %s16, 1
      %p160 = scmp.ne.s32.totalorder %s155, %s157
      %p161 = scmp.eq.s32.totalorder %s16, 0
      %p162 = por %p160, %p161
      %p163 = scmp.ne.s32.totalorder %s155, %s157
      %p164 = scmp.eq.s32.totalorder %s21, 1
      %p165 = por %p163, %p164
      %p166 = scmp.ne.s32.totalorder %s157, %s158
      %p167 = scmp.eq.s32.totalorder %s21, 0
      %p168 = por %p166, %p167
      %p169 = scmp.ne.s32.totalorder %s157, %s158
      %p170 = scmp.eq.s32.totalorder %s22, 1
      %p171 = por %p169, %p170
      %p173 = scmp.ne.s32.totalorder %s158, %s172
      %p174 = scmp.eq.s32.totalorder %s22, 0
      %p175 = por %p173, %p174
      %s176 = ssub.s32 %s16, %s23
      %p177 = scmp.eq.s32.totalorder %s176, 0
      %s179 = sadd.s32 %s178, 1
      %s180 = scalar_select %p177, %s178, %s179
      %p183 = pneg %p177
      %p184 = scmp.eq.s32.totalorder %s16, 1
      %p185 = por %p183, %p184
      %p186 = scmp.ne.s32.totalorder %s178, %s181
      %p187 = scmp.eq.s32.totalorder %s16, 0
      %p188 = por %p186, %p187
      %p189 = scmp.ne.s32.totalorder %s178, %s181
      %p190 = scmp.eq.s32.totalorder %s21, 1
      %p191 = por %p189, %p190
      %p192 = scmp.ne.s32.totalorder %s181, %s182
      %p193 = scmp.eq.s32.totalorder %s21, 0
      %p194 = por %p192, %p193
      %p195 = scmp.ne.s32.totalorder %s181, %s182
      %p196 = scmp.eq.s32.totalorder %s22, 1
      %p197 = por %p195, %p196
      %p199 = scmp.ne.s32.totalorder %s182, %s198
      %p200 = scmp.eq.s32.totalorder %s22, 0
      %p201 = por %p199, %p200
      %p202 = scmp.le.s32.totalorder 1, %s16
      %p203 = scmp.lt.s32.totalorder %s16, 3
      %p204 = pnand %p202, %p203
      %p205 = pneg %p204
      // Predicated region
      $region9: #{tpu_custom_call.1} parent=5 // pred_check
        _
      $region10: #{tpu_custom_call.1} parent=5 // pred_check_branch
        %207 = sbr.rel (%p204) target = $region12
      $region11: #{tpu_custom_call.1} parent=5 // pred_region
        %s208 = ssub.s32 %s16, 1
        // Predicated region
        $region13: #{tpu_custom_call.1} parent=11 // pred_check
          %p209 = pneg %p63
        $region14: #{tpu_custom_call.1} parent=11 // pred_check_branch
          %211 = sbr.rel (%p209) target = $region16
        $region15: #{tpu_custom_call.1} parent=11 // pred_region
          _
        $region16: #{tpu_custom_call.1} parent=11 // pred_fallthru
          _
        // Predicated region
        $region17: #{tpu_custom_call.1} parent=11 // pred_check
          %p212 = pneg %p84
        $region18: #{tpu_custom_call.1} parent=11 // pred_check_branch
          %214 = sbr.rel (%p212) target = $region20
        $region19: #{tpu_custom_call.1} parent=11 // pred_region
          _
        $region20: #{tpu_custom_call.1} parent=11 // pred_fallthru
          _
        // Predicated region
        $region21: #{tpu_custom_call.1} parent=11 // pred_check
          %p215 = pneg %p105
        $region22: #{tpu_custom_call.1} parent=11 // pred_check_branch
          %217 = sbr.rel (%p215) target = $region24
        $region23: #{tpu_custom_call.1} parent=11 // pred_region
          _
        $region24: #{tpu_custom_call.1} parent=11 // pred_fallthru
          _
        // Predicated region
        $region25: #{tpu_custom_call.1} parent=11 // pred_check
          %p218 = pneg %p126
        $region26: #{tpu_custom_call.1} parent=11 // pred_check_branch
          %220 = sbr.rel (%p218) target = $region28
        $region27: #{tpu_custom_call.1} parent=11 // pred_region
          _
        $region28: #{tpu_custom_call.1} parent=11 // pred_fallthru
          _
        // Predicated region
        $region29: #{tpu_custom_call.1} parent=11 // pred_check
          %p221 = pneg %p147
        $region30: #{tpu_custom_call.1} parent=11 // pred_check_branch
          %223 = sbr.rel (%p221) target = $region32
        $region31: #{tpu_custom_call.1} parent=11 // pred_region
          _
        $region32: #{tpu_custom_call.1} parent=11 // pred_fallthru
          _
        // Predicated region
        $region33: #{tpu_custom_call.1} parent=11 // pred_check
          %p224 = pneg %p168
        $region34: #{tpu_custom_call.1} parent=11 // pred_check_branch
          %226 = sbr.rel (%p224) target = $region36
        $region35: #{tpu_custom_call.1} parent=11 // pred_region
          _
        $region36: #{tpu_custom_call.1} parent=11 // pred_fallthru
          _
      $region12: #{tpu_custom_call.1} parent=5 // pred_fallthru
        _
      %p227 = scmp.lt.s32.totalorder %s16, 2
      // Predicated region
      $region37: #{tpu_custom_call.1} parent=5 // pred_check
        %p228 = pneg %p227
      $region38: #{tpu_custom_call.1} parent=5 // pred_check_branch
        %230 = sbr.rel (%p228) target = $region40
      $region39: #{tpu_custom_call.1} parent=5 // pred_region
        // Predicated region
        $region41: #{tpu_custom_call.1} parent=39 // pred_check
          %p231 = pneg %p36
        $region42: #{tpu_custom_call.1} parent=39 // pred_check_branch
          %233 = sbr.rel (%p231) target = $region44
        $region43: #{tpu_custom_call.1} parent=39 // pred_region
          %p234 = scmp.lt.s32.totalorder %s16, 1
          %s235 = scalar_select %p234, %s16, 1
          %s236 = smul.addr %s235, 2
          %s237 = smul.addr %s236, 4
          %s238 = scalar_lea.vmem %s0, %s237
        $region44: #{tpu_custom_call.1} parent=39 // pred_fallthru
          _
      $region40: #{tpu_custom_call.1} parent=5 // pred_fallthru
        _
      %p239 = scmp.le.s32.totalorder 1, %s16
      %p240 = scmp.lt.s32.totalorder %s16, 3
      %p241 = pnand %p239, %p240
      %p242 = pneg %p241
      // Predicated region
      $region45: #{tpu_custom_call.1} parent=5 // pred_check
        _
      $region46: #{tpu_custom_call.1} parent=5 // pred_check_branch
        %244 = sbr.rel (%p241) target = $region48
      $region47: #{tpu_custom_call.1} parent=5 // pred_region
        %s245 = ssub.s32 %s16, 1
        %p246 = scmp.lt.s32.totalorder %s21, 1
        %s247 = scalar_select %p246, %s21, 1
        %s248 = smul.addr %s247, 2
        %s249 = smul.addr %s248, 4
        %s250 = scalar_lea.vmem %s0, %s249
        %p251 = pneg %p42
        %p252 = pneg %p39
        %p253 = pneg %p63
        %p254 = pneg %p60
        %p255 = pneg %p84
        %p256 = pneg %p81
        %p257 = pneg %p105
        %p258 = pneg %p102
        %p259 = pneg %p126
        %p260 = pneg %p123
        %p261 = pneg %p147
        %p262 = pneg %p144
        %p263 = pneg %p168
        %p264 = pneg %p165
        %p265 = pneg %p194
        %p266 = pneg %p191
        %s267 = sand.u32 %s181, 1
        %s268 = scalar_lea.sflag [#allocation4], %s267
        %s269 = sand.u32 %s181, 1
        %s270 = smul.addr %s269, 8
        %s271 = scalar_lea.vmem [#allocation3], %s270
        %p272 = scmp.lt.s32.totalorder %s21, 1
        %s273 = scalar_select %p272, %s21, 1
        %s274 = smul.addr %s273, 2
        %s275 = smul.addr %s274, 4
        %s276 = scalar_lea.vmem %s0, %s275
        %v277 = vld [vmem:[%s276] sm:$0xff]
        %v278 = vld [vmem:[%s2] sm:$0xff]
        %v279 = vld [vmem:[%s2 + $0x8] sm:$0xff]
        %v280 = vld [vmem:[%s2 + $0x10] sm:$0xff]
        %v281 = vld [vmem:[%s1] sm:$0xff]
        %v282 = vld [vmem:[%s1 + $0x8] sm:$0xff]
        %v283 = vld [vmem:[%s1 + $0x10] sm:$0xff]
        %285 = vset.pattern.permute.xlu0 0
        %286 = vperm.xlu0 %285, %v278
        %v287 = vpop.permute.xlu0 %286
        %290 = vset.pattern.permute.xlu0 0
        %291 = vperm.xlu0 %290, %v279
        %v292 = vpop.permute.xlu0 %291
        %295 = vset.pattern.permute.xlu0 0
        %296 = vperm.xlu0 %295, %v280
        %v297 = vpop.permute.xlu0 %296
        %v300 = vcombine.high %v277, %v277
        %vm301 = vcmask 31744
        %v303 = vsel %vm301, %v281, 0
        %v306 = vsel %vm301, %v282, 0
        %v309 = vsel %vm301, %v283, 0
        %vm311 = vcmask 1043456
        %v312 = vsel %vm311, %v277, 0
        %v314 = vsel %vm311, %v300, 0
        %316 = vmatprep.subr.mxu0 0.0
        %317 = vmatpush1.msra.mxu0 0.0
        %318 = vmatprep.subr.mxu0 0.0
        %319 = vmatpush1.msra.mxu0 0.0
        %320 = vmatprep.subr.mxu0 0.0
        %321 = vmatpush1.msra.mxu0 0.0
        %322 = vmatprep.subr.mxu0 0.0
        %323 = vmatpush1.msra.mxu0 0.0
        %324 = vmatprep.subr.mxu0 0.0
        %325 = vmatpush1.msra.mxu0 0.0
        %326 = vmatprep.subr.mxu0 0.0
        %327 = vmatpush1.msra.mxu0 0.0
        %328 = vmatprep.subr.mxu0 0.0
        %329 = vmatpush1.msra.mxu0 0.0
        %330 = vmatprep.subr.mxu0 0.0
        %331 = vmatpush1.msra.mxu0 0.0
        %332 = vmatprep.subr.mxu0 0.0
        %333 = vmatpush1.msra.mxu0 0.0
        %334 = vmatprep.subr.mxu0 0.0
        %335 = vmatpush1.msra.mxu0 0.0
        %336 = vmatprep.subr.mxu0 0.0
        %337 = vmatpush1.msra.mxu0 0.0
        %338 = vmatprep.subr.mxu0 0.0
        %339 = vmatpush1.msra.mxu0 0.0
        %340 = vmatprep.subr.mxu0 0.0
        %341 = vmatpush1.msra.mxu0 0.0
        %342 = vmatprep.subr.mxu0 0.0
        %343 = vmatpush1.msra.mxu0 0.0
        %344 = vmatprep.subr.mxu0 0.0
        %345 = vmatpush1.msra.mxu0 0.0
        %346 = vmatprep.subr.mxu0 %v314
        %347 = vmatpush1.msra.mxu0 %v312
        %348 = vmatprep.subr.mxu0 0.0
        %349 = vmatpush2.msra.mxu0 0.0
        %350 = vmatprep.subr.mxu0 0.0
        %351 = vmatpush2.msra.mxu0 0.0
        %352 = vmatprep.subr.mxu0 0.0
        %353 = vmatpush2.msra.mxu0 0.0
        %354 = vmatprep.subr.mxu0 0.0
        %355 = vmatpush2.msra.mxu0 0.0
        %356 = vmatprep.subr.mxu0 0.0
        %357 = vmatpush2.msra.mxu0 0.0
        %358 = vmatprep.subr.mxu0 0.0
        %359 = vmatpush2.msra.mxu0 0.0
        %360 = vmatprep.subr.mxu0 0.0
        %361 = vmatpush2.msra.mxu0 0.0
        %362 = vmatprep.subr.mxu0 0.0
        %363 = vmatpush2.msra.mxu0 0.0
        %364 = vmatprep.subr.mxu0 0.0
        %365 = vmatpush2.msra.mxu0 0.0
        %366 = vmatprep.subr.mxu0 0.0
        %367 = vmatpush2.msra.mxu0 0.0
        %368 = vmatprep.subr.mxu0 0.0
        %369 = vmatpush2.msra.mxu0 0.0
        %370 = vmatprep.subr.mxu0 0.0
        %371 = vmatpush2.msra.mxu0 0.0
        %372 = vmatprep.subr.mxu0 0.0
        %373 = vmatpush2.msra.mxu0 0.0
        %374 = vmatprep.subr.mxu0 0.0
        %375 = vmatpush2.msra.mxu0 0.0
        %376 = vmatprep.subr.mxu0 0.0
        %377 = vmatpush2.msra.mxu0 0.0
        %378 = vmatprep.subr.mxu0 0.0
        %379 = vmatpush2.msra.mxu0 0.0
        %380 = vmatprep.mubr.f32.mxu0 0.0
        %381 = vmatmul.mubr.f32.gmra.mxu0 %v303
        %v382 = vpop.f32.mrf.mxu0
        %v383 = vadd.f32 %v287, %v382
        %v384 = vpop.f32.mrf.mxu0
        %v385 = vadd.f32 %v287, %v384
        %386 = vmatprep.mubr.f32.mxu0 0.0
        %387 = vmatmul.mubr.f32.gmra.mxu0 %v306
        %v388 = vpop.f32.mrf.mxu0
        %v389 = vadd.f32 %v292, %v388
        %v390 = vpop.f32.mrf.mxu0
        %v391 = vadd.f32 %v292, %v390
        %392 = vmatprep.mubr.f32.mxu0 0.0
        %393 = vmatmul.mubr.f32.gmra.mxu0 %v309
        %v394 = vpop.f32.mrf.mxu0
        %v395 = vadd.f32 %v297, %v394
        %v396 = vpop.f32.mrf.mxu0
        %v397 = vadd.f32 %v297, %v396
        %398 = vdwg.mxu0
        %v399 = vmax.f32 %v383, 0.0
        %v400 = vmax.f32 %v385, 0.0
        %v401 = vmax.f32 %v389, 0.0
        %v402 = vmax.f32 %v391, 0.0
        %v403 = vmax.f32 %v395, 0.0
        %v404 = vmax.f32 %v397, 0.0
        %v405 = vmin.f32 %v399, 6.0
        %v406 = vmin.f32 %v400, 6.0
        %v407 = vmin.f32 %v401, 6.0
        %v408 = vmin.f32 %v402, 6.0
        %v409 = vmin.f32 %v403, 6.0
        %v410 = vmin.f32 %v404, 6.0
        %v411 = vmax.f32 %v278, 0.0
        %v412 = vmax.f32 %v279, 0.0
        %v413 = vmax.f32 %v280, 0.0
        %v414 = vmin.f32 %v411, 6.0
        %v415 = vmin.f32 %v412, 6.0
        %v416 = vmin.f32 %v413, 6.0
        %418 = vset.pattern.permute.xlu0 0
        %419 = vperm.xlu0 %418, %v414
        %v420 = vpop.permute.xlu0 %419
        %423 = vset.pattern.permute.xlu0 0
        %424 = vperm.xlu0 %423, %v415
        %v425 = vpop.permute.xlu0 %424
        %428 = vset.pattern.permute.xlu0 0
        %429 = vperm.xlu0 %428, %v416
        %v430 = vpop.permute.xlu0 %429
        %432 = vst [vmem:[#allocation2] sm:$0xff] %v420
        %433 = vst [vmem:[#allocation2 + $0x8] sm:$0xff] %v420
        %vm434 = vcmask 556032
        %435 = vst.msk [vmem:[#allocation2 + $0x10] sm:$0xff] %vm434, %v420
        %436 = vst [vmem:[#allocation2 + $0x18] sm:$0xff] %v425
        %437 = vst [vmem:[#allocation2 + $0x20] sm:$0xff] %v425
        %438 = vst.msk [vmem:[#allocation2 + $0x28] sm:$0xff] %vm434, %v425
        %439 = vst [vmem:[#allocation2 + $0x30] sm:$0xff] %v430
        %440 = vst [vmem:[#allocation2 + $0x38] sm:$0xff] %v430
        %441 = vst.msk [vmem:[#allocation2 + $0x40] sm:$0xff] %vm434, %v430
        %445 = vrot.lane.b32.xlu0 %v405, 19
        %v446 = vpop.permute.xlu0 %445
        %447 = vrot.lane.b32.xlu0 %v407, 19
        %v448 = vpop.permute.xlu0 %447
        %449 = vrot.lane.b32.xlu0 %v409, 19
        %v450 = vpop.permute.xlu0 %449
        %vm454 = vcmask 285848
        %455 = vst.msk [vmem:[#allocation2] sm:$0xff] %vm454, %v446
        %456 = vst.msk [vmem:[#allocation2 + $0x18] sm:$0xff] %vm454, %v448
        %457 = vst.msk [vmem:[#allocation2 + $0x30] sm:$0xff] %vm454, %v450
        %458 = vrot.lane.b32.xlu0 %v405, 21
        %v459 = vpop.permute.xlu0 %458
        %460 = vrot.lane.b32.xlu0 %v407, 21
        %v461 = vpop.permute.xlu0 %460
        %462 = vrot.lane.b32.xlu0 %v409, 21
        %v463 = vpop.permute.xlu0 %462
        %vm467 = vcmask 433448
        %468 = vst.msk [vmem:[#allocation2] sm:$0xff] %vm467, %v459
        %469 = vst.msk [vmem:[#allocation2 + $0x18] sm:$0xff] %vm467, %v461
        %470 = vst.msk [vmem:[#allocation2 + $0x30] sm:$0xff] %vm467, %v463
        %471 = vrot.lane.b32.xlu0 %v405, 23
        %v472 = vpop.permute.xlu0 %471
        %473 = vrot.lane.b32.xlu0 %v407, 23
        %v474 = vpop.permute.xlu0 %473
        %475 = vrot.lane.b32.xlu0 %v409, 23
        %v476 = vpop.permute.xlu0 %475
        %vm480 = vcmask 581048
        %481 = vst.msk [vmem:[#allocation2] sm:$0xff] %vm480, %v472
        %482 = vst.msk [vmem:[#allocation2 + $0x18] sm:$0xff] %vm480, %v474
        %483 = vst.msk [vmem:[#allocation2 + $0x30] sm:$0xff] %vm480, %v476
        %484 = vrot.lane.b32.xlu0 %v405, 25
        %v485 = vpop.permute.xlu0 %484
        %486 = vrot.lane.b32.xlu0 %v407, 25
        %v487 = vpop.permute.xlu0 %486
        %488 = vrot.lane.b32.xlu0 %v409, 25
        %v489 = vpop.permute.xlu0 %488
        %vm493 = vcmask 728648
        %494 = vst.msk [vmem:[#allocation2] sm:$0xff] %vm493, %v485
        %495 = vst.msk [vmem:[#allocation2 + $0x18] sm:$0xff] %vm493, %v487
        %496 = vst.msk [vmem:[#allocation2 + $0x30] sm:$0xff] %vm493, %v489
        %497 = vrot.lane.b32.xlu0 %v405, 27
        %v498 = vpop.permute.xlu0 %497
        %499 = vrot.lane.b32.xlu0 %v407, 27
        %v500 = vpop.permute.xlu0 %499
        %501 = vrot.lane.b32.xlu0 %v409, 27
        %v502 = vpop.permute.xlu0 %501
        %vm506 = vcmask 876248
        %507 = vst.msk [vmem:[#allocation2] sm:$0xff] %vm506, %v498
        %508 = vst.msk [vmem:[#allocation2 + $0x18] sm:$0xff] %vm506, %v500
        %509 = vst.msk [vmem:[#allocation2 + $0x30] sm:$0xff] %vm506, %v502
        %510 = vrot.lane.b32.xlu0 %v405, 29
        %v511 = vpop.permute.xlu0 %510
        %512 = vrot.lane.b32.xlu0 %v407, 29
        %v513 = vpop.permute.xlu0 %512
        %514 = vrot.lane.b32.xlu0 %v409, 29
        %v515 = vpop.permute.xlu0 %514
        %vm519 = vcmask 1023848
        %520 = vst.msk [vmem:[#allocation2] sm:$0xff] %vm519, %v511
        %521 = vst.msk [vmem:[#allocation2 + $0x18] sm:$0xff] %vm519, %v513
        %522 = vst.msk [vmem:[#allocation2 + $0x30] sm:$0xff] %vm519, %v515
        %523 = vrot.lane.b32.xlu0 %v405, 31
        %v524 = vpop.permute.xlu0 %523
        %525 = vrot.lane.b32.xlu0 %v407, 31
        %v526 = vpop.permute.xlu0 %525
        %527 = vrot.lane.b32.xlu0 %v409, 31
        %v528 = vpop.permute.xlu0 %527
        %vm532 = vcmask 1048568
        %533 = vst.msk [vmem:[#allocation2] sm:$0xff] %vm532, %v524
        %vm534 = vcmask 121856
        %535 = vst.msk [vmem:[#allocation2 + $0x8] sm:$0xff] %vm534, %v524
        %536 = vst.msk [vmem:[#allocation2 + $0x18] sm:$0xff] %vm532, %v526
        %537 = vst.msk [vmem:[#allocation2 + $0x20] sm:$0xff] %vm534, %v526
        %538 = vst.msk [vmem:[#allocation2 + $0x30] sm:$0xff] %vm532, %v528
        %539 = vst.msk [vmem:[#allocation2 + $0x38] sm:$0xff] %vm534, %v528
        %540 = vrot.lane.b32.xlu0 %v405, 33
        %v541 = vpop.permute.xlu0 %540
        %542 = vrot.lane.b32.xlu0 %v407, 33
        %v543 = vpop.permute.xlu0 %542
        %544 = vrot.lane.b32.xlu0 %v409, 33
        %v545 = vpop.permute.xlu0 %544
        %vm549 = vcmask 269448
        %550 = vst.msk [vmem:[#allocation2 + $0x8] sm:$0xff] %vm549, %v541
        %551 = vst.msk [vmem:[#allocation2 + $0x20] sm:$0xff] %vm549, %v543
        %552 = vst.msk [vmem:[#allocation2 + $0x38] sm:$0xff] %vm549, %v545
        %556 = vrot.lane.b32.xlu0 %v406, 35
        %v557 = vpop.permute.xlu0 %556
        %558 = vrot.lane.b32.xlu0 %v408, 35
        %v559 = vpop.permute.xlu0 %558
        %560 = vrot.lane.b32.xlu0 %v410, 35
        %v561 = vpop.permute.xlu0 %560
        %vm565 = vcmask 417048
        %566 = vst.msk [vmem:[#allocation2 + $0x8] sm:$0xff] %vm565, %v557
        %567 = vst.msk [vmem:[#allocation2 + $0x20] sm:$0xff] %vm565, %v559
        %568 = vst.msk [vmem:[#allocation2 + $0x38] sm:$0xff] %vm565, %v561
        %569 = vrot.lane.b32.xlu0 %v406, 37
        %v570 = vpop.permute.xlu0 %569
        %571 = vrot.lane.b32.xlu0 %v408, 37
        %v572 = vpop.permute.xlu0 %571
        %573 = vrot.lane.b32.xlu0 %v410, 37
        %v574 = vpop.permute.xlu0 %573
        %vm578 = vcmask 564648
        %579 = vst.msk [vmem:[#allocation2 + $0x8] sm:$0xff] %vm578, %v570
        %580 = vst.msk [vmem:[#allocation2 + $0x20] sm:$0xff] %vm578, %v572
        %581 = vst.msk [vmem:[#allocation2 + $0x38] sm:$0xff] %vm578, %v574
        %582 = vrot.lane.b32.xlu0 %v406, 39
        %v583 = vpop.permute.xlu0 %582
        %584 = vrot.lane.b32.xlu0 %v408, 39
        %v585 = vpop.permute.xlu0 %584
        %586 = vrot.lane.b32.xlu0 %v410, 39
        %v587 = vpop.permute.xlu0 %586
        %vm591 = vcmask 712248
        %592 = vst.msk [vmem:[#allocation2 + $0x8] sm:$0xff] %vm591, %v583
        %593 = vst.msk [vmem:[#allocation2 + $0x20] sm:$0xff] %vm591, %v585
        %594 = vst.msk [vmem:[#allocation2 + $0x38] sm:$0xff] %vm591, %v587
        %595 = vrot.lane.b32.xlu0 %v406, 41
        %v596 = vpop.permute.xlu0 %595
        %597 = vrot.lane.b32.xlu0 %v408, 41
        %v598 = vpop.permute.xlu0 %597
        %599 = vrot.lane.b32.xlu0 %v410, 41
        %v600 = vpop.permute.xlu0 %599
        %vm604 = vcmask 859848
        %605 = vst.msk [vmem:[#allocation2 + $0x8] sm:$0xff] %vm604, %v596
        %606 = vst.msk [vmem:[#allocation2 + $0x20] sm:$0xff] %vm604, %v598
        %607 = vst.msk [vmem:[#allocation2 + $0x38] sm:$0xff] %vm604, %v600
        %608 = vrot.lane.b32.xlu0 %v406, 43
        %v609 = vpop.permute.xlu0 %608
        %610 = vrot.lane.b32.xlu0 %v408, 43
        %v611 = vpop.permute.xlu0 %610
        %612 = vrot.lane.b32.xlu0 %v410, 43
        %v613 = vpop.permute.xlu0 %612
        %vm617 = vcmask 1007448
        %618 = vst.msk [vmem:[#allocation2 + $0x8] sm:$0xff] %vm617, %v609
        %619 = vst.msk [vmem:[#allocation2 + $0x20] sm:$0xff] %vm617, %v611
        %620 = vst.msk [vmem:[#allocation2 + $0x38] sm:$0xff] %vm617, %v613
        %621 = vrot.lane.b32.xlu0 %v406, 45
        %v622 = vpop.permute.xlu0 %621
        %623 = vrot.lane.b32.xlu0 %v408, 45
        %v624 = vpop.permute.xlu0 %623
        %625 = vrot.lane.b32.xlu0 %v410, 45
        %v626 = vpop.permute.xlu0 %625
        %vm630 = vcmask 1048552
        %631 = vst.msk [vmem:[#allocation2 + $0x8] sm:$0xff] %vm630, %v622
        %vm632 = vcmask 105472
        %633 = vst.msk [vmem:[#allocation2 + $0x10] sm:$0xff] %vm632, %v622
        %634 = vst.msk [vmem:[#allocation2 + $0x20] sm:$0xff] %vm630, %v624
        %635 = vst.msk [vmem:[#allocation2 + $0x28] sm:$0xff] %vm632, %v624
        %636 = vst.msk [vmem:[#allocation2 + $0x38] sm:$0xff] %vm630, %v626
        %637 = vst.msk [vmem:[#allocation2 + $0x40] sm:$0xff] %vm632, %v626
        %638 = vrot.lane.b32.xlu0 %v406, 47
        %v639 = vpop.permute.xlu0 %638
        %640 = vrot.lane.b32.xlu0 %v408, 47
        %v641 = vpop.permute.xlu0 %640
        %642 = vrot.lane.b32.xlu0 %v410, 47
        %v643 = vpop.permute.xlu0 %642
        %vm647 = vcmask 253048
        %648 = vst.msk [vmem:[#allocation2 + $0x10] sm:$0xff] %vm647, %v639
        %649 = vst.msk [vmem:[#allocation2 + $0x28] sm:$0xff] %vm647, %v641
        %650 = vst.msk [vmem:[#allocation2 + $0x40] sm:$0xff] %vm647, %v643
        %651 = vrot.lane.b32.xlu0 %v406, 49
        %v652 = vpop.permute.xlu0 %651
        %653 = vrot.lane.b32.xlu0 %v408, 49
        %v654 = vpop.permute.xlu0 %653
        %655 = vrot.lane.b32.xlu0 %v410, 49
        %v656 = vpop.permute.xlu0 %655
        %vm660 = vcmask 400648
        %661 = vst.msk [vmem:[#allocation2 + $0x10] sm:$0xff] %vm660, %v652
        %662 = vst.msk [vmem:[#allocation2 + $0x28] sm:$0xff] %vm660, %v654
        %663 = vst.msk [vmem:[#allocation2 + $0x40] sm:$0xff] %vm660, %v656
        %v664 = vld [vmem:[#allocation2] sm:$0xff]
        %v665 = vld [vmem:[#allocation2 + $0x8] sm:$0xff]
        %v666 = vld [vmem:[#allocation2 + $0x10] sm:$0xff]
        %v667 = vld [vmem:[#allocation2 + $0x18] sm:$0xff]
        %v668 = vld [vmem:[#allocation2 + $0x20] sm:$0xff]
        %v669 = vld [vmem:[#allocation2 + $0x28] sm:$0xff]
        %v670 = vld [vmem:[#allocation2 + $0x30] sm:$0xff]
        %v671 = vld [vmem:[#allocation2 + $0x38] sm:$0xff]
        %v672 = vld [vmem:[#allocation2 + $0x40] sm:$0xff]
        %v673 = vld [vmem:[%s3] sm:$0xff]
        %v674 = vld [vmem:[%s3 + $0x8] sm:$0xff]
        %v675 = vld [vmem:[%s3 + $0x10] sm:$0xff]
        %677 = vset.pattern.permute.xlu0 0
        %678 = vperm.xlu0 %677, %v673
        %v679 = vpop.permute.xlu0 %678
        %682 = vset.pattern.permute.xlu0 0
        %683 = vperm.xlu0 %682, %v674
        %v684 = vpop.permute.xlu0 %683
        %687 = vset.pattern.permute.xlu0 0
        %688 = vperm.xlu0 %687, %v675
        %v689 = vpop.permute.xlu0 %688
        %v691 = vmul.f32 %v664, %v679
        %v692 = vmul.f32 %v665, %v679
        %v693 = vmul.f32 %v666, %v679
        %v694 = vmul.f32 %v667, %v684
        %v695 = vmul.f32 %v668, %v684
        %v696 = vmul.f32 %v669, %v684
        %v697 = vmul.f32 %v670, %v689
        %v698 = vmul.f32 %v671, %v689
        %v699 = vmul.f32 %v672, %v689
        %700 = vset.pattern.permute.xlu0 1
        %701 = vperm.xlu0 %700, %v673
        %v702 = vpop.permute.xlu0 %701
        %704 = vset.pattern.permute.xlu0 1
        %705 = vperm.xlu0 %704, %v674
        %v706 = vpop.permute.xlu0 %705
        %708 = vset.pattern.permute.xlu0 1
        %709 = vperm.xlu0 %708, %v675
        %v710 = vpop.permute.xlu0 %709
        %v712 = vmul.f32 %v664, %v702
        %v713 = vmul.f32 %v665, %v702
        %v714 = vmul.f32 %v666, %v702
        %v715 = vmul.f32 %v667, %v706
        %v716 = vmul.f32 %v668, %v706
        %v717 = vmul.f32 %v669, %v706
        %v718 = vmul.f32 %v670, %v710
        %v719 = vmul.f32 %v671, %v710
        %v720 = vmul.f32 %v672, %v710
        %730 = vrot.lane.b32.xlu0 %v712, 127
        %v731 = vpop.permute.xlu0 %730
        %732 = vrot.lane.b32.xlu0 %v713, 127
        %v733 = vpop.permute.xlu0 %732
        %734 = vrot.lane.b32.xlu0 %v714, 127
        %v735 = vpop.permute.xlu0 %734
        %736 = vrot.lane.b32.xlu0 %v715, 127
        %v737 = vpop.permute.xlu0 %736
        %738 = vrot.lane.b32.xlu0 %v716, 127
        %v739 = vpop.permute.xlu0 %738
        %740 = vrot.lane.b32.xlu0 %v717, 127
        %v741 = vpop.permute.xlu0 %740
        %742 = vrot.lane.b32.xlu0 %v718, 127
        %v743 = vpop.permute.xlu0 %742
        %744 = vrot.lane.b32.xlu0 %v719, 127
        %v745 = vpop.permute.xlu0 %744
        %746 = vrot.lane.b32.xlu0 %v720, 127
        %v747 = vpop.permute.xlu0 %746
        %vm748 = vcmask 1039360
        %v749 = vsel %vm748, %v731, %v733
        %v750 = vsel %vm748, %v733, %v735
        %v751 = vsel %vm748, %v737, %v739
        %v752 = vsel %vm748, %v739, %v741
        %v753 = vsel %vm748, %v743, %v745
        %v754 = vsel %vm748, %v745, %v747
        %v764 = vadd.f32 %v691, %v749
        %v765 = vadd.f32 %v692, %v750
        %v766 = vadd.f32 %v693, %v735
        %v767 = vadd.f32 %v694, %v751
        %v768 = vadd.f32 %v695, %v752
        %v769 = vadd.f32 %v696, %v741
        %v770 = vadd.f32 %v697, %v753
        %v771 = vadd.f32 %v698, %v754
        %v772 = vadd.f32 %v699, %v747
        %773 = vset.pattern.permute.xlu0 2
        %774 = vperm.xlu0 %773, %v673
        %v775 = vpop.permute.xlu0 %774
        %777 = vset.pattern.permute.xlu0 2
        %778 = vperm.xlu0 %777, %v674
        %v779 = vpop.permute.xlu0 %778
        %781 = vset.pattern.permute.xlu0 2
        %782 = vperm.xlu0 %781, %v675
        %v783 = vpop.permute.xlu0 %782
        %v785 = vmul.f32 %v664, %v775
        %v786 = vmul.f32 %v665, %v775
        %v787 = vmul.f32 %v666, %v775
        %v788 = vmul.f32 %v667, %v779
        %v789 = vmul.f32 %v668, %v779
        %v790 = vmul.f32 %v669, %v779
        %v791 = vmul.f32 %v670, %v783
        %v792 = vmul.f32 %v671, %v783
        %v793 = vmul.f32 %v672, %v783
        %803 = vrot.lane.b32.xlu0 %v785, 126
        %v804 = vpop.permute.xlu0 %803
        %805 = vrot.lane.b32.xlu0 %v786, 126
        %v806 = vpop.permute.xlu0 %805
        %807 = vrot.lane.b32.xlu0 %v787, 126
        %v808 = vpop.permute.xlu0 %807
        %809 = vrot.lane.b32.xlu0 %v788, 126
        %v810 = vpop.permute.xlu0 %809
        %811 = vrot.lane.b32.xlu0 %v789, 126
        %v812 = vpop.permute.xlu0 %811
        %813 = vrot.lane.b32.xlu0 %v790, 126
        %v814 = vpop.permute.xlu0 %813
        %815 = vrot.lane.b32.xlu0 %v791, 126
        %v816 = vpop.permute.xlu0 %815
        %817 = vrot.lane.b32.xlu0 %v792, 126
        %v818 = vpop.permute.xlu0 %817
        %819 = vrot.lane.b32.xlu0 %v793, 126
        %v820 = vpop.permute.xlu0 %819
        %vm821 = vcmask 1031168
        %v822 = vsel %vm821, %v804, %v806
        %v823 = vsel %vm821, %v806, %v808
        %v824 = vsel %vm821, %v810, %v812
        %v825 = vsel %vm821, %v812, %v814
        %v826 = vsel %vm821, %v816, %v818
        %v827 = vsel %vm821, %v818, %v820
        %v837 = vadd.f32 %v764, %v822
        %v838 = vadd.f32 %v765, %v823
        %v839 = vadd.f32 %v766, %v808
        %v840 = vadd.f32 %v767, %v824
        %v841 = vadd.f32 %v768, %v825
        %v842 = vadd.f32 %v769, %v814
        %v843 = vadd.f32 %v770, %v826
        %v844 = vadd.f32 %v771, %v827
        %v845 = vadd.f32 %v772, %v820
        %846 = vset.pattern.permute.xlu0 3
        %847 = vperm.xlu0 %846, %v673
        %v848 = vpop.permute.xlu0 %847
        %850 = vset.pattern.permute.xlu0 3
        %851 = vperm.xlu0 %850, %v674
        %v852 = vpop.permute.xlu0 %851
        %854 = vset.pattern.permute.xlu0 3
        %855 = vperm.xlu0 %854, %v675
        %v856 = vpop.permute.xlu0 %855
        %v858 = vmul.f32 %v664, %v848
        %v859 = vmul.f32 %v665, %v848
        %v860 = vmul.f32 %v666, %v848
        %v861 = vmul.f32 %v667, %v852
        %v862 = vmul.f32 %v668, %v852
        %v863 = vmul.f32 %v669, %v852
        %v864 = vmul.f32 %v670, %v856
        %v865 = vmul.f32 %v671, %v856
        %v866 = vmul.f32 %v672, %v856
        %876 = vrot.lane.b32.xlu0 %v858, 110
        %v877 = vpop.permute.xlu0 %876
        %878 = vrot.lane.b32.xlu0 %v859, 110
        %v879 = vpop.permute.xlu0 %878
        %880 = vrot.lane.b32.xlu0 %v860, 110
        %v881 = vpop.permute.xlu0 %880
        %882 = vrot.lane.b32.xlu0 %v861, 110
        %v883 = vpop.permute.xlu0 %882
        %884 = vrot.lane.b32.xlu0 %v862, 110
        %v885 = vpop.permute.xlu0 %884
        %886 = vrot.lane.b32.xlu0 %v863, 110
        %v887 = vpop.permute.xlu0 %886
        %888 = vrot.lane.b32.xlu0 %v864, 110
        %v889 = vpop.permute.xlu0 %888
        %890 = vrot.lane.b32.xlu0 %v865, 110
        %v891 = vpop.permute.xlu0 %890
        %892 = vrot.lane.b32.xlu0 %v866, 110
        %v893 = vpop.permute.xlu0 %892
        %vm894 = vcmask 900096
        %v895 = vsel %vm894, %v877, %v879
        %v896 = vsel %vm894, %v879, %v881
        %v897 = vsel %vm894, %v883, %v885
        %v898 = vsel %vm894, %v885, %v887
        %v899 = vsel %vm894, %v889, %v891
        %v900 = vsel %vm894, %v891, %v893
        %v910 = vadd.f32 %v837, %v895
        %v911 = vadd.f32 %v838, %v896
        %v912 = vadd.f32 %v839, %v881
        %v913 = vadd.f32 %v840, %v897
        %v914 = vadd.f32 %v841, %v898
        %v915 = vadd.f32 %v842, %v887
        %v916 = vadd.f32 %v843, %v899
        %v917 = vadd.f32 %v844, %v900
        %v918 = vadd.f32 %v845, %v893
        %919 = vset.pattern.permute.xlu0 4
        %920 = vperm.xlu0 %919, %v673
        %v921 = vpop.permute.xlu0 %920
        %923 = vset.pattern.permute.xlu0 4
        %924 = vperm.xlu0 %923, %v674
        %v925 = vpop.permute.xlu0 %924
        %927 = vset.pattern.permute.xlu0 4
        %928 = vperm.xlu0 %927, %v675
        %v929 = vpop.permute.xlu0 %928
        %v931 = vmul.f32 %v664, %v921
        %v932 = vmul.f32 %v665, %v921
        %v933 = vmul.f32 %v666, %v921
        %v934 = vmul.f32 %v667, %v925
        %v935 = vmul.f32 %v668, %v925
        %v936 = vmul.f32 %v669, %v925
        %v937 = vmul.f32 %v670, %v929
        %v938 = vmul.f32 %v671, %v929
        %v939 = vmul.f32 %v672, %v929
        %949 = vrot.lane.b32.xlu0 %v931, 109
        %v950 = vpop.permute.xlu0 %949
        %951 = vrot.lane.b32.xlu0 %v932, 109
        %v952 = vpop.permute.xlu0 %951
        %953 = vrot.lane.b32.xlu0 %v933, 109
        %v954 = vpop.permute.xlu0 %953
        %955 = vrot.lane.b32.xlu0 %v934, 109
        %v956 = vpop.permute.xlu0 %955
        %957 = vrot.lane.b32.xlu0 %v935, 109
        %v958 = vpop.permute.xlu0 %957
        %959 = vrot.lane.b32.xlu0 %v936, 109
        %v960 = vpop.permute.xlu0 %959
        %961 = vrot.lane.b32.xlu0 %v937, 109
        %v962 = vpop.permute.xlu0 %961
        %963 = vrot.lane.b32.xlu0 %v938, 109
        %v964 = vpop.permute.xlu0 %963
        %965 = vrot.lane.b32.xlu0 %v939, 109
        %v966 = vpop.permute.xlu0 %965
        %vm967 = vcmask 891904
        %v968 = vsel %vm967, %v950, %v952
        %v969 = vsel %vm967, %v952, %v954
        %v970 = vsel %vm967, %v956, %v958
        %v971 = vsel %vm967, %v958, %v960
        %v972 = vsel %vm967, %v962, %v964
        %v973 = vsel %vm967, %v964, %v966
        %v983 = vadd.f32 %v910, %v968
        %v984 = vadd.f32 %v911, %v969
        %v985 = vadd.f32 %v912, %v954
        %v986 = vadd.f32 %v913, %v970
        %v987 = vadd.f32 %v914, %v971
        %v988 = vadd.f32 %v915, %v960
        %v989 = vadd.f32 %v916, %v972
        %v990 = vadd.f32 %v917, %v973
        %v991 = vadd.f32 %v918, %v966
        %992 = vset.pattern.permute.xlu0 5
        %993 = vperm.xlu0 %992, %v673
        %v994 = vpop.permute.xlu0 %993
        %996 = vset.pattern.permute.xlu0 5
        %997 = vperm.xlu0 %996, %v674
        %v998 = vpop.permute.xlu0 %997
        %1000 = vset.pattern.permute.xlu0 5
        %1001 = vperm.xlu0 %1000, %v675
        %v1002 = vpop.permute.xlu0 %1001
        %v1004 = vmul.f32 %v664, %v994
        %v1005 = vmul.f32 %v665, %v994
        %v1006 = vmul.f32 %v666, %v994
        %v1007 = vmul.f32 %v667, %v998
        %v1008 = vmul.f32 %v668, %v998
        %v1009 = vmul.f32 %v669, %v998
        %v1010 = vmul.f32 %v670, %v1002
        %v1011 = vmul.f32 %v671, %v1002
        %v1012 = vmul.f32 %v672, %v1002
        %1022 = vrot.lane.b32.xlu0 %v1004, 108
        %v1023 = vpop.permute.xlu0 %1022
        %1024 = vrot.lane.b32.xlu0 %v1005, 108
        %v1025 = vpop.permute.xlu0 %1024
        %1026 = vrot.lane.b32.xlu0 %v1006, 108
        %v1027 = vpop.permute.xlu0 %1026
        %1028 = vrot.lane.b32.xlu0 %v1007, 108
        %v1029 = vpop.permute.xlu0 %1028
        %1030 = vrot.lane.b32.xlu0 %v1008, 108
        %v1031 = vpop.permute.xlu0 %1030
        %1032 = vrot.lane.b32.xlu0 %v1009, 108
        %v1033 = vpop.permute.xlu0 %1032
        %1034 = vrot.lane.b32.xlu0 %v1010, 108
        %v1035 = vpop.permute.xlu0 %1034
        %1036 = vrot.lane.b32.xlu0 %v1011, 108
        %v1037 = vpop.permute.xlu0 %1036
        %1038 = vrot.lane.b32.xlu0 %v1012, 108
        %v1039 = vpop.permute.xlu0 %1038
        %vm1040 = vcmask 883712
        %v1041 = vsel %vm1040, %v1023, %v1025
        %v1042 = vsel %vm1040, %v1025, %v1027
        %v1043 = vsel %vm1040, %v1029, %v1031
        %v1044 = vsel %vm1040, %v1031, %v1033
        %v1045 = vsel %vm1040, %v1035, %v1037
        %v1046 = vsel %vm1040, %v1037, %v1039
        %v1056 = vadd.f32 %v983, %v1041
        %v1057 = vadd.f32 %v984, %v1042
        %v1058 = vadd.f32 %v985, %v1027
        %v1059 = vadd.f32 %v986, %v1043
        %v1060 = vadd.f32 %v987, %v1044
        %v1061 = vadd.f32 %v988, %v1033
        %v1062 = vadd.f32 %v989, %v1045
        %v1063 = vadd.f32 %v990, %v1046
        %v1064 = vadd.f32 %v991, %v1039
        %1065 = vset.pattern.permute.xlu0 6
        %1066 = vperm.xlu0 %1065, %v673
        %v1067 = vpop.permute.xlu0 %1066
        %1069 = vset.pattern.permute.xlu0 6
        %1070 = vperm.xlu0 %1069, %v674
        %v1071 = vpop.permute.xlu0 %1070
        %1073 = vset.pattern.permute.xlu0 6
        %1074 = vperm.xlu0 %1073, %v675
        %v1075 = vpop.permute.xlu0 %1074
        %v1077 = vmul.f32 %v664, %v1067
        %v1078 = vmul.f32 %v665, %v1067
        %v1079 = vmul.f32 %v666, %v1067
        %v1080 = vmul.f32 %v667, %v1071
        %v1081 = vmul.f32 %v668, %v1071
        %v1082 = vmul.f32 %v669, %v1071
        %v1083 = vmul.f32 %v670, %v1075
        %v1084 = vmul.f32 %v671, %v1075
        %v1085 = vmul.f32 %v672, %v1075
        %1095 = vrot.lane.b32.xlu0 %v1077, 92
        %v1096 = vpop.permute.xlu0 %1095
        %1097 = vrot.lane.b32.xlu0 %v1078, 92
        %v1098 = vpop.permute.xlu0 %1097
        %1099 = vrot.lane.b32.xlu0 %v1079, 92
        %v1100 = vpop.permute.xlu0 %1099
        %1101 = vrot.lane.b32.xlu0 %v1080, 92
        %v1102 = vpop.permute.xlu0 %1101
        %1103 = vrot.lane.b32.xlu0 %v1081, 92
        %v1104 = vpop.permute.xlu0 %1103
        %1105 = vrot.lane.b32.xlu0 %v1082, 92
        %v1106 = vpop.permute.xlu0 %1105
        %1107 = vrot.lane.b32.xlu0 %v1083, 92
        %v1108 = vpop.permute.xlu0 %1107
        %1109 = vrot.lane.b32.xlu0 %v1084, 92
        %v1110 = vpop.permute.xlu0 %1109
        %1111 = vrot.lane.b32.xlu0 %v1085, 92
        %v1112 = vpop.permute.xlu0 %1111
        %vm1113 = vcmask 752640
        %v1114 = vsel %vm1113, %v1096, %v1098
        %v1115 = vsel %vm1113, %v1098, %v1100
        %v1116 = vsel %vm1113, %v1102, %v1104
        %v1117 = vsel %vm1113, %v1104, %v1106
        %v1118 = vsel %vm1113, %v1108, %v1110
        %v1119 = vsel %vm1113, %v1110, %v1112
        %v1129 = vadd.f32 %v1056, %v1114
        %v1130 = vadd.f32 %v1057, %v1115
        %v1131 = vadd.f32 %v1058, %v1100
        %v1132 = vadd.f32 %v1059, %v1116
        %v1133 = vadd.f32 %v1060, %v1117
        %v1134 = vadd.f32 %v1061, %v1106
        %v1135 = vadd.f32 %v1062, %v1118
        %v1136 = vadd.f32 %v1063, %v1119
        %v1137 = vadd.f32 %v1064, %v1112
        %1138 = vset.pattern.permute.xlu0 7
        %1139 = vperm.xlu0 %1138, %v673
        %v1140 = vpop.permute.xlu0 %1139
        %1142 = vset.pattern.permute.xlu0 7
        %1143 = vperm.xlu0 %1142, %v674
        %v1144 = vpop.permute.xlu0 %1143
        %1146 = vset.pattern.permute.xlu0 7
        %1147 = vperm.xlu0 %1146, %v675
        %v1148 = vpop.permute.xlu0 %1147
        %v1150 = vmul.f32 %v664, %v1140
        %v1151 = vmul.f32 %v665, %v1140
        %v1152 = vmul.f32 %v666, %v1140
        %v1153 = vmul.f32 %v667, %v1144
        %v1154 = vmul.f32 %v668, %v1144
        %v1155 = vmul.f32 %v669, %v1144
        %v1156 = vmul.f32 %v670, %v1148
        %v1157 = vmul.f32 %v671, %v1148
        %v1158 = vmul.f32 %v672, %v1148
        %1168 = vrot.lane.b32.xlu0 %v1150, 91
        %v1169 = vpop.permute.xlu0 %1168
        %1170 = vrot.lane.b32.xlu0 %v1151, 91
        %v1171 = vpop.permute.xlu0 %1170
        %1172 = vrot.lane.b32.xlu0 %v1152, 91
        %v1173 = vpop.permute.xlu0 %1172
        %1174 = vrot.lane.b32.xlu0 %v1153, 91
        %v1175 = vpop.permute.xlu0 %1174
        %1176 = vrot.lane.b32.xlu0 %v1154, 91
        %v1177 = vpop.permute.xlu0 %1176
        %1178 = vrot.lane.b32.xlu0 %v1155, 91
        %v1179 = vpop.permute.xlu0 %1178
        %1180 = vrot.lane.b32.xlu0 %v1156, 91
        %v1181 = vpop.permute.xlu0 %1180
        %1182 = vrot.lane.b32.xlu0 %v1157, 91
        %v1183 = vpop.permute.xlu0 %1182
        %1184 = vrot.lane.b32.xlu0 %v1158, 91
        %v1185 = vpop.permute.xlu0 %1184
        %vm1186 = vcmask 744448
        %v1187 = vsel %vm1186, %v1169, %v1171
        %v1188 = vsel %vm1186, %v1171, %v1173
        %v1189 = vsel %vm1186, %v1175, %v1177
        %v1190 = vsel %vm1186, %v1177, %v1179
        %v1191 = vsel %vm1186, %v1181, %v1183
        %v1192 = vsel %vm1186, %v1183, %v1185
        %v1202 = vadd.f32 %v1129, %v1187
        %v1203 = vadd.f32 %v1130, %v1188
        %v1204 = vadd.f32 %v1131, %v1173
        %v1205 = vadd.f32 %v1132, %v1189
        %v1206 = vadd.f32 %v1133, %v1190
        %v1207 = vadd.f32 %v1134, %v1179
        %v1208 = vadd.f32 %v1135, %v1191
        %v1209 = vadd.f32 %v1136, %v1192
        %v1210 = vadd.f32 %v1137, %v1185
        %1211 = vset.pattern.permute.xlu0 8
        %1212 = vperm.xlu0 %1211, %v673
        %v1213 = vpop.permute.xlu0 %1212
        %1215 = vset.pattern.permute.xlu0 8
        %1216 = vperm.xlu0 %1215, %v674
        %v1217 = vpop.permute.xlu0 %1216
        %1219 = vset.pattern.permute.xlu0 8
        %1220 = vperm.xlu0 %1219, %v675
        %v1221 = vpop.permute.xlu0 %1220
        %v1223 = vmul.f32 %v664, %v1213
        %v1224 = vmul.f32 %v665, %v1213
        %v1225 = vmul.f32 %v666, %v1213
        %v1226 = vmul.f32 %v667, %v1217
        %v1227 = vmul.f32 %v668, %v1217
        %v1228 = vmul.f32 %v669, %v1217
        %v1229 = vmul.f32 %v670, %v1221
        %v1230 = vmul.f32 %v671, %v1221
        %v1231 = vmul.f32 %v672, %v1221
        %1241 = vrot.lane.b32.xlu0 %v1223, 90
        %v1242 = vpop.permute.xlu0 %1241
        %1243 = vrot.lane.b32.xlu0 %v1224, 90
        %v1244 = vpop.permute.xlu0 %1243
        %1245 = vrot.lane.b32.xlu0 %v1225, 90
        %v1246 = vpop.permute.xlu0 %1245
        %1247 = vrot.lane.b32.xlu0 %v1226, 90
        %v1248 = vpop.permute.xlu0 %1247
        %1249 = vrot.lane.b32.xlu0 %v1227, 90
        %v1250 = vpop.permute.xlu0 %1249
        %1251 = vrot.lane.b32.xlu0 %v1228, 90
        %v1252 = vpop.permute.xlu0 %1251
        %1253 = vrot.lane.b32.xlu0 %v1229, 90
        %v1254 = vpop.permute.xlu0 %1253
        %1255 = vrot.lane.b32.xlu0 %v1230, 90
        %v1256 = vpop.permute.xlu0 %1255
        %1257 = vrot.lane.b32.xlu0 %v1231, 90
        %v1258 = vpop.permute.xlu0 %1257
        %vm1259 = vcmask 736256
        %v1260 = vsel %vm1259, %v1242, %v1244
        %v1261 = vsel %vm1259, %v1244, %v1246
        %v1262 = vsel %vm1259, %v1248, %v1250
        %v1263 = vsel %vm1259, %v1250, %v1252
        %v1264 = vsel %vm1259, %v1254, %v1256
        %v1265 = vsel %vm1259, %v1256, %v1258
        %v1275 = vadd.f32 %v1202, %v1260
        %v1276 = vadd.f32 %v1203, %v1261
        %v1277 = vadd.f32 %v1204, %v1246
        %v1278 = vadd.f32 %v1205, %v1262
        %v1279 = vadd.f32 %v1206, %v1263
        %v1280 = vadd.f32 %v1207, %v1252
        %v1281 = vadd.f32 %v1208, %v1264
        %v1282 = vadd.f32 %v1209, %v1265
        %v1283 = vadd.f32 %v1210, %v1258
        %v1284 = vld [vmem:[%s4] sm:$0xff]
        %v1285 = vld [vmem:[%s4 + $0x8] sm:$0xff]
        %v1286 = vld [vmem:[%s4 + $0x10] sm:$0xff]
        %1288 = vset.pattern.permute.xlu0 0
        %1289 = vperm.xlu0 %1288, %v1284
        %v1290 = vpop.permute.xlu0 %1289
        %1293 = vset.pattern.permute.xlu0 0
        %1294 = vperm.xlu0 %1293, %v1285
        %v1295 = vpop.permute.xlu0 %1294
        %1298 = vset.pattern.permute.xlu0 0
        %1299 = vperm.xlu0 %1298, %v1286
        %v1300 = vpop.permute.xlu0 %1299
        %v1302 = vadd.f32 %v1275, %v1290
        %v1303 = vadd.f32 %v1276, %v1290
        %v1304 = vadd.f32 %v1277, %v1290
        %v1305 = vadd.f32 %v1278, %v1295
        %v1306 = vadd.f32 %v1279, %v1295
        %v1307 = vadd.f32 %v1280, %v1295
        %v1308 = vadd.f32 %v1281, %v1300
        %v1309 = vadd.f32 %v1282, %v1300
        %v1310 = vadd.f32 %v1283, %v1300
        %v1311 = vmax.f32 %v1302, 0.0
        %v1312 = vmax.f32 %v1303, 0.0
        %v1313 = vmax.f32 %v1304, 0.0
        %v1314 = vmax.f32 %v1305, 0.0
        %v1315 = vmax.f32 %v1306, 0.0
        %v1316 = vmax.f32 %v1307, 0.0
        %v1317 = vmax.f32 %v1308, 0.0
        %v1318 = vmax.f32 %v1309, 0.0
        %v1319 = vmax.f32 %v1310, 0.0
        %v1320 = vmin.f32 %v1311, 6.0
        %v1321 = vmin.f32 %v1312, 6.0
        %v1322 = vmin.f32 %v1313, 6.0
        %v1323 = vmin.f32 %v1314, 6.0
        %v1324 = vmin.f32 %v1315, 6.0
        %v1325 = vmin.f32 %v1316, 6.0
        %v1326 = vmin.f32 %v1317, 6.0
        %v1327 = vmin.f32 %v1318, 6.0
        %v1328 = vmin.f32 %v1319, 6.0
        %v1329 = vld [vmem:[%s5] sm:$0xf]
        %v1330 = vld [vmem:[%s6] sm:$0xf]
        %1332 = vset.pattern.permute.xlu0 0
        %1333 = vperm.xlu0 %1332, %v1330
        %v1334 = vpop.permute.xlu0 %1333
        %vm1336 = vcmask 195584
        %v1338 = vsel %vm1336, %v1329, 0
        %1340 = vmatprep.subr.mxu0 0.0
        %1341 = vmatpush1.msra.mxu0 0.0
        %1342 = vmatprep.subr.mxu0 0.0
        %1343 = vmatpush1.msra.mxu0 0.0
        %1344 = vmatprep.subr.mxu0 0.0
        %1345 = vmatpush1.msra.mxu0 0.0
        %1346 = vmatprep.subr.mxu0 0.0
        %1347 = vmatpush1.msra.mxu0 0.0
        %1348 = vmatprep.subr.mxu0 0.0
        %1349 = vmatpush1.msra.mxu0 0.0
        %1350 = vmatprep.subr.mxu0 0.0
        %1351 = vmatpush1.msra.mxu0 0.0
        %1352 = vmatprep.subr.mxu0 0.0
        %1353 = vmatpush1.msra.mxu0 0.0
        %1354 = vmatprep.subr.mxu0 0.0
        %1355 = vmatpush1.msra.mxu0 0.0
        %1356 = vmatprep.subr.mxu0 0.0
        %1357 = vmatpush1.msra.mxu0 0.0
        %1358 = vmatprep.subr.mxu0 0.0
        %1359 = vmatpush1.msra.mxu0 0.0
        %1360 = vmatprep.subr.mxu0 0.0
        %1361 = vmatpush1.msra.mxu0 0.0
        %1362 = vmatprep.subr.mxu0 0.0
        %1363 = vmatpush1.msra.mxu0 0.0
        %1364 = vmatprep.subr.mxu0 0.0
        %1365 = vmatpush1.msra.mxu0 0.0
        %1366 = vmatprep.subr.mxu0 %v1327
        %1367 = vmatpush1.msra.mxu0 %v1326
        %1368 = vmatprep.subr.mxu0 %v1324
        %1369 = vmatpush1.msra.mxu0 %v1323
        %1370 = vmatprep.subr.mxu0 %v1321
        %1371 = vmatpush1.msra.mxu0 %v1320
        %1372 = vmatprep.subr.mxu0 0.0
        %1373 = vmatpush2.msra.mxu0 0.0
        %1374 = vmatprep.subr.mxu0 0.0
        %1375 = vmatpush2.msra.mxu0 0.0
        %1376 = vmatprep.subr.mxu0 0.0
        %1377 = vmatpush2.msra.mxu0 0.0
        %1378 = vmatprep.subr.mxu0 0.0
        %1379 = vmatpush2.msra.mxu0 0.0
        %1380 = vmatprep.subr.mxu0 0.0
        %1381 = vmatpush2.msra.mxu0 0.0
        %1382 = vmatprep.subr.mxu0 0.0
        %1383 = vmatpush2.msra.mxu0 0.0
        %1384 = vmatprep.subr.mxu0 0.0
        %1385 = vmatpush2.msra.mxu0 0.0
        %1386 = vmatprep.subr.mxu0 0.0
        %1387 = vmatpush2.msra.mxu0 0.0
        %1388 = vmatprep.subr.mxu0 0.0
        %1389 = vmatpush2.msra.mxu0 0.0
        %1390 = vmatprep.subr.mxu0 0.0
        %1391 = vmatpush2.msra.mxu0 0.0
        %1392 = vmatprep.subr.mxu0 0.0
        %1393 = vmatpush2.msra.mxu0 0.0
        %1394 = vmatprep.subr.mxu0 0.0
        %1395 = vmatpush2.msra.mxu0 0.0
        %1396 = vmatprep.subr.mxu0 0.0
        %1397 = vmatpush2.msra.mxu0 0.0
        %1398 = vmatprep.subr.mxu0 0.0
        %1399 = vmatpush2.msra.mxu0 0.0
        %1400 = vmatprep.subr.mxu0 0.0
        %1401 = vmatpush2.msra.mxu0 0.0
        %1402 = vmatprep.subr.mxu0 0.0
        %1403 = vmatpush2.msra.mxu0 0.0
        %1404 = vmatprep.mubr.f32.mxu0 0.0
        %1405 = vmatmul.mubr.f32.gmra.mxu0 %v1338
        %v1406 = vpop.f32.mrf.mxu0
        %v1407 = vadd.f32 %v1334, %v1406
        %v1408 = vpop.f32.mrf.mxu0
        %v1409 = vadd.f32 %v1334, %v1408
        %1410 = vdwg.mxu0
        %1411 = vmatprep.subr.mxu0 0.0
        %1412 = vmatpush1.msra.mxu0 0.0
        %1413 = vmatprep.subr.mxu0 0.0
        %1414 = vmatpush1.msra.mxu0 0.0
        %1415 = vmatprep.subr.mxu0 0.0
        %1416 = vmatpush1.msra.mxu0 0.0
        %1417 = vmatprep.subr.mxu0 0.0
        %1418 = vmatpush1.msra.mxu0 0.0
        %1419 = vmatprep.subr.mxu0 0.0
        %1420 = vmatpush1.msra.mxu0 0.0
        %1421 = vmatprep.subr.mxu0 0.0
        %1422 = vmatpush1.msra.mxu0 0.0
        %1423 = vmatprep.subr.mxu0 0.0
        %1424 = vmatpush1.msra.mxu0 0.0
        %1425 = vmatprep.subr.mxu0 0.0
        %1426 = vmatpush1.msra.mxu0 0.0
        %1427 = vmatprep.subr.mxu0 0.0
        %1428 = vmatpush1.msra.mxu0 0.0
        %1429 = vmatprep.subr.mxu0 0.0
        %1430 = vmatpush1.msra.mxu0 0.0
        %1431 = vmatprep.subr.mxu0 0.0
        %1432 = vmatpush1.msra.mxu0 0.0
        %1433 = vmatprep.subr.mxu0 0.0
        %1434 = vmatpush1.msra.mxu0 0.0
        %1435 = vmatprep.subr.mxu0 0.0
        %1436 = vmatpush1.msra.mxu0 0.0
        %1437 = vmatprep.subr.mxu0 0.0
        %1438 = vmatpush1.msra.mxu0 %v1328
        %1439 = vmatprep.subr.mxu0 0.0
        %1440 = vmatpush1.msra.mxu0 %v1325
        %1441 = vmatprep.subr.mxu0 0.0
        %1442 = vmatpush1.msra.mxu0 %v1322
        %1443 = vmatprep.subr.mxu0 0.0
        %1444 = vmatpush2.msra.mxu0 0.0
        %1445 = vmatprep.subr.mxu0 0.0
        %1446 = vmatpush2.msra.mxu0 0.0
        %1447 = vmatprep.subr.mxu0 0.0
        %1448 = vmatpush2.msra.mxu0 0.0
        %1449 = vmatprep.subr.mxu0 0.0
        %1450 = vmatpush2.msra.mxu0 0.0
        %1451 = vmatprep.subr.mxu0 0.0
        %1452 = vmatpush2.msra.mxu0 0.0
        %1453 = vmatprep.subr.mxu0 0.0
        %1454 = vmatpush2.msra.mxu0 0.0
        %1455 = vmatprep.subr.mxu0 0.0
        %1456 = vmatpush2.msra.mxu0 0.0
        %1457 = vmatprep.subr.mxu0 0.0
        %1458 = vmatpush2.msra.mxu0 0.0
        %1459 = vmatprep.subr.mxu0 0.0
        %1460 = vmatpush2.msra.mxu0 0.0
        %1461 = vmatprep.subr.mxu0 0.0
        %1462 = vmatpush2.msra.mxu0 0.0
        %1463 = vmatprep.subr.mxu0 0.0
        %1464 = vmatpush2.msra.mxu0 0.0
        %1465 = vmatprep.subr.mxu0 0.0
        %1466 = vmatpush2.msra.mxu0 0.0
        %1467 = vmatprep.subr.mxu0 0.0
        %1468 = vmatpush2.msra.mxu0 0.0
        %1469 = vmatprep.subr.mxu0 0.0
        %1470 = vmatpush2.msra.mxu0 0.0
        %1471 = vmatprep.subr.mxu0 0.0
        %1472 = vmatpush2.msra.mxu0 0.0
        %1473 = vmatprep.subr.mxu0 0.0
        %1474 = vmatpush2.msra.mxu0 0.0
        %1475 = vmatprep.mubr.f32.mxu0 0.0
        %1476 = vmatmul.mubr.f32.gmra.mxu0 %v1338
        %v1477 = vpop.f32.mrf.mxu0
        %v1478 = vadd.f32 %v1334, %v1477
        %v1479 = vpop.f32.mrf.mxu0
        %1480 = vdwg.mxu0
        %v1481 = vadd.f32 %v1407, %v277
        %vm1482 = vcmask 125952
        %1483 = vst.msk [vmem:[%s271] sm:$0xf] %vm1482, %v1481
        %1484 = vrot.lane.b32.xlu0 %v277, 2
        %v1485 = vpop.permute.xlu0 %1484
        %v1487 = vadd.f32 %v1407, %v1485
        %1489 = vrot.lane.b32.xlu0 %v1487, 126
        %v1490 = vpop.permute.xlu0 %1489
        %vm1492 = vcmask 257152
        %1493 = vst.msk [vmem:[%s271] sm:$0xf] %vm1492, %v1490
        %1494 = vrot.lane.b32.xlu0 %v277, 4
        %v1495 = vpop.permute.xlu0 %1494
        %v1497 = vadd.f32 %v1407, %v1495
        %1499 = vrot.lane.b32.xlu0 %v1497, 124
        %v1500 = vpop.permute.xlu0 %1499
        %vm1502 = vcmask 388352
        %1503 = vst.msk [vmem:[%s271] sm:$0xf] %vm1502, %v1500
        %1504 = vrot.lane.b32.xlu0 %v277, 6
        %v1505 = vpop.permute.xlu0 %1504
        %v1507 = vadd.f32 %v1407, %v1505
        %1509 = vrot.lane.b32.xlu0 %v1507, 122
        %v1510 = vpop.permute.xlu0 %1509
        %vm1512 = vcmask 519552
        %1513 = vst.msk [vmem:[%s271] sm:$0xf] %vm1512, %v1510
        %1514 = vrot.lane.b32.xlu0 %v277, 8
        %v1515 = vpop.permute.xlu0 %1514
        %v1517 = vadd.f32 %v1407, %v1515
        %1519 = vrot.lane.b32.xlu0 %v1517, 120
        %v1520 = vpop.permute.xlu0 %1519
        %vm1522 = vcmask 650752
        %1523 = vst.msk [vmem:[%s271] sm:$0xf] %vm1522, %v1520
        %1524 = vrot.lane.b32.xlu0 %v277, 10
        %v1525 = vpop.permute.xlu0 %1524
        %v1527 = vadd.f32 %v1407, %v1525
        %1529 = vrot.lane.b32.xlu0 %v1527, 118
        %v1530 = vpop.permute.xlu0 %1529
        %vm1532 = vcmask 781952
        %1533 = vst.msk [vmem:[%s271] sm:$0xf] %vm1532, %v1530
        %1534 = vrot.lane.b32.xlu0 %v277, 12
        %v1535 = vpop.permute.xlu0 %1534
        %v1537 = vadd.f32 %v1407, %v1535
        %1539 = vrot.lane.b32.xlu0 %v1537, 116
        %v1540 = vpop.permute.xlu0 %1539
        %vm1542 = vcmask 913152
        %1543 = vst.msk [vmem:[%s271] sm:$0xf] %vm1542, %v1540
        %1544 = vrot.lane.b32.xlu0 %v277, 14
        %v1545 = vpop.permute.xlu0 %1544
        %v1547 = vadd.f32 %v1407, %v1545
        %v1548 = vadd.f32 %v1409, %v1545
        %v1551 = vcombine.low %v1547, %v1548
        %1552 = vrot.lane.b32.xlu0 %v1551, 114
        %v1553 = vpop.permute.xlu0 %1552
        %v1554 = vrot.slane %v1553, 4
        %vm1555 = vcmask 932864
        %v1556 = vsel %vm1555, %v1553, %v1554
        %vm1558 = vcmask 1044352
        %1559 = vst.msk [vmem:[%s271] sm:$0xf] %vm1558, %v1556
        %1560 = vrot.lane.b32.xlu0 %v300, 16
        %v1561 = vpop.permute.xlu0 %1560
        %v1563 = vadd.f32 %v1409, %v1561
        %1565 = vrot.lane.b32.xlu0 %v1563, 112
        %v1566 = vpop.permute.xlu0 %1565
        %1568 = vst.msk [vmem:[%s271 + $0x4] sm:$0xf] %vm1482, %v1566
        %1569 = vrot.lane.b32.xlu0 %v300, 18
        %v1570 = vpop.permute.xlu0 %1569
        %v1572 = vadd.f32 %v1409, %v1570
        %1574 = vrot.lane.b32.xlu0 %v1572, 110
        %v1575 = vpop.permute.xlu0 %1574
        %1577 = vst.msk [vmem:[%s271 + $0x4] sm:$0xf] %vm1492, %v1575
        %1578 = vrot.lane.b32.xlu0 %v300, 20
        %v1579 = vpop.permute.xlu0 %1578
        %v1581 = vadd.f32 %v1409, %v1579
        %1583 = vrot.lane.b32.xlu0 %v1581, 108
        %v1584 = vpop.permute.xlu0 %1583
        %1586 = vst.msk [vmem:[%s271 + $0x4] sm:$0xf] %vm1502, %v1584
        %1587 = vrot.lane.b32.xlu0 %v300, 22
        %v1588 = vpop.permute.xlu0 %1587
        %v1590 = vadd.f32 %v1409, %v1588
        %1592 = vrot.lane.b32.xlu0 %v1590, 106
        %v1593 = vpop.permute.xlu0 %1592
        %1595 = vst.msk [vmem:[%s271 + $0x4] sm:$0xf] %vm1512, %v1593
        %1596 = vrot.lane.b32.xlu0 %v300, 24
        %v1597 = vpop.permute.xlu0 %1596
        %v1599 = vadd.f32 %v1409, %v1597
        %1601 = vrot.lane.b32.xlu0 %v1599, 104
        %v1602 = vpop.permute.xlu0 %1601
        %1604 = vst.msk [vmem:[%s271 + $0x4] sm:$0xf] %vm1522, %v1602
        %1605 = vrot.lane.b32.xlu0 %v300, 26
        %v1606 = vpop.permute.xlu0 %1605
        %v1608 = vadd.f32 %v1409, %v1606
        %1610 = vrot.lane.b32.xlu0 %v1608, 102
        %v1611 = vpop.permute.xlu0 %1610
        %1613 = vst.msk [vmem:[%s271 + $0x4] sm:$0xf] %vm1532, %v1611
        %1614 = vrot.lane.b32.xlu0 %v300, 28
        %v1615 = vpop.permute.xlu0 %1614
        %v1617 = vadd.f32 %v1409, %v1615
        %v1618 = vadd.f32 %v1478, %v1615
        %v1621 = vcombine.low %v1617, %v1618
        %1622 = vrot.lane.b32.xlu0 %v1621, 100
        %v1623 = vpop.permute.xlu0 %1622
        %v1624 = vrot.slane %v1623, 4
        %vm1625 = vcmask 818176
        %v1626 = vsel %vm1625, %v1623, %v1624
        %1628 = vst.msk [vmem:[%s271 + $0x4] sm:$0xf] %vm1542, %v1626
        %1629 = vrot.lane.b32.xlu0 %v300, 30
        %v1630 = vpop.permute.xlu0 %1629
        %v1632 = vadd.f32 %v1478, %v1630
        %1634 = vrot.lane.b32.xlu0 %v1632, 98
        %v1635 = vpop.permute.xlu0 %1634
        %1637 = vst.msk [vmem:[%s271 + $0x4] sm:$0xf] %vm1558, %v1635
        %s1638 = sand.u32 %s181, 1
        %s1639 = scalar_lea.sflag [#allocation4], %s1638
        %s1640 = sand.u32 %s181, 1
        %s1641 = smul.addr %s1640, 8
        %s1642 = scalar_lea.vmem [#allocation3], %s1641
        // Predicated region
        $region49: #{tpu_custom_call.1} parent=47 // pred_check
          %p1643 = pneg %p191
        $region50: #{tpu_custom_call.1} parent=47 // pred_check_branch
          %1645 = sbr.rel (%p1643) target = $region52
        $region51: #{tpu_custom_call.1} parent=47 // pred_region
          %s1647 = ssub.s32 128, 128
          %1648 = vsyncadd %s1639, %s1647
          %s1649 = smul.addr %s21, 2
          %s1650 = smul.addr %s1649, 64
          %s1651 = scalar_lea.hbm %s7, %s1650
          %s1653 = sshll.u32 %s1642, 4
          %s1654 = int_to_ptr.vmem [resolvable:$true] %s1653
          %1656 = dma.vmem_to_hbm [thread:$0]  %s1654, 128, %s1651, %s1639
        $region52: #{tpu_custom_call.1} parent=47 // pred_fallthru
          _
      $region48: #{tpu_custom_call.1} parent=5 // pred_fallthru
        _
      %p1657 = scmp.le.s32.totalorder 2, %s16
      // Predicated region
      $region53: #{tpu_custom_call.1} parent=5 // pred_check
        %p1658 = pneg %p1657
      $region54: #{tpu_custom_call.1} parent=5 // pred_check_branch
        %1660 = sbr.rel (%p1658) target = $region56
      $region55: #{tpu_custom_call.1} parent=5 // pred_region
        %s1661 = ssub.s32 %s16, 2
        // Predicated region
        $region57: #{tpu_custom_call.1} parent=55 // pred_check
          %p1662 = pneg %p197
        $region58: #{tpu_custom_call.1} parent=55 // pred_check_branch
          %1664 = sbr.rel (%p1662) target = $region60
        $region59: #{tpu_custom_call.1} parent=55 // pred_region
          %s1665 = sand.u32 %s182, 1
          %s1666 = scalar_lea.sflag [#allocation4], %s1665
          %s1667 = sand.u32 %s182, 1
          %s1668 = smul.addr %s1667, 8
          %s1669 = scalar_lea.vmem [#allocation3], %s1668
          %1670 = dma.done %s1666, 128
        $region60: #{tpu_custom_call.1} parent=55 // pred_fallthru
          _
      $region56: #{tpu_custom_call.1} parent=5 // pred_fallthru
        _
    $region6: #{tpu_custom_call.1} parent=1 // loop_footer
      %s20 = sadd.s32 1, %s16
    $region7: #{tpu_custom_call.1} parent=1 // loop_footer_branch
      %15 = sbr.rel target = $region3
    $region8: #{tpu_custom_call.1} parent=1 // loop_exit
      _
    %1671 = vsyncpa [#allocation4], 1
    %s1672 = scalar_lea.sflag [#allocation4], 1
    %1673 = vsyncpa %s1672, 1

</llo_original>
